<compile_context>
chip_gen: v6e
topology: v6e:2x2x1
jax: 0.10.0
libtpu: 0.0.40
codegen_flags: <defaults>
</compile_context>

<pallas_src>
import jax
import jax.numpy as jnp
from jax.experimental import pallas as pl
from jax.experimental.pallas import tpu as pltpu


# --------------------------------------------------------------------------- #
# Kernel
# --------------------------------------------------------------------------- #
def il_update_kernel(feats_ref, actions_ref, mw_ref, h0_ref,
                     wxh_ref, whh_ref, bh_ref, who_ref, bo_ref,
                     per_env_ref, hfin_ref,
                     h_carry, lacc, wacc, hstore):
    Tt, Nt, F = feats_ref.shape
    H = h0_ref.shape[1]
    A = who_ref.shape[1]
    store_dtype = hstore.dtype
    mxu_dtype = whh_ref.dtype

    t_idx = pl.program_id(1)
    n_t = pl.num_programs(1)

    # ---- init carried state at the first T tile of each env block ----
    @pl.when(t_idx == 0)
    def _init():
        h_carry[...] = h0_ref[...]
        lacc[...] = jnp.zeros_like(lacc)
        wacc[...] = jnp.zeros_like(wacc)

    wxh = wxh_ref[...]
    whh = whh_ref[...]
    bh = bh_ref[...]
    who = who_ref[...]
    bo = bo_ref[...]

    # ---- Phase 1: batched input projection (one MXU matmul per tile) ----
    x2 = feats_ref[...].reshape(Tt * Nt, F)
    xproj = jnp.dot(x2, wxh, preferred_element_type=jnp.float32) + bh   # (Tt*Nt, H) f32
    hstore[...] = xproj.reshape(Tt, Nt, H).astype(store_dtype)

    # ---- Phase 2: serial recurrence — only (m*h)@Whh + tanh on the critical path ----
    def step(i, h):
        m_i = mw_ref[i][:, 0:1]                                         # (Nt, 1) masks
        h_in = (h * m_i).astype(mxu_dtype)                              # bf16 MXU operand
        pre = hstore[i].astype(jnp.float32) + jnp.dot(
            h_in, whh, preferred_element_type=jnp.float32)
        h_new = jnp.tanh(pre)                                           # f32 carry
        hstore[i] = h_new.astype(store_dtype)                           # stash h_t for Phase 3
        return h_new

    # Partial unroll: gives the LLO scheduler visibility to overlap the
    # hstore/mask loads + address math with the matmul->tanh dependence chain.
    h_last = jax.lax.fori_loop(0, Tt, step, h_carry[...], unroll=min(Tt, 8))
    h_carry[...] = h_last

    # ---- Phase 3: batched logits + cross-entropy over the whole tile ----
    hs = hstore[...].reshape(Tt * Nt, H)
    logits = jnp.dot(hs, who, preferred_element_type=jnp.float32) + bo  # (Tt*Nt, A) f32
    row_max = jnp.max(logits, axis=-1, keepdims=True)
    lse = row_max + jnp.log(
        jnp.sum(jnp.exp(logits - row_max), axis=-1, keepdims=True))
    acts = actions_ref[...].reshape(Tt * Nt, 1)
    onehot = jax.lax.broadcasted_iota(jnp.int32, (Tt * Nt, A), 1) == acts
    tgt = jnp.sum(jnp.where(onehot, logits, 0.0), axis=-1, keepdims=True)
    ce = (lse - tgt).reshape(Tt, Nt, 1)                                 # (Tt, Nt, 1)

    w = mw_ref[...][:, :, 1:2]                                          # (Tt, Nt, 1) weights
    lacc[...] += jnp.sum(w * ce, axis=0)                                # (Nt, 1)
    wacc[...] += jnp.sum(w, axis=0)

    # ---- finalize at the last T tile of this env block ----
    @pl.when(t_idx == n_t - 1)
    def _finalize():
        per_env_ref[...] = lacc[...] / wacc[...]
        hfin_ref[...] = h_carry[...]


# --------------------------------------------------------------------------- #
# Sizing helpers (generation aware)
# --------------------------------------------------------------------------- #
def _round_up(x, m):
    return ((x + m - 1) // m) * m


def _tpu_device_kind():
    try:
        return jax.devices()[0].device_kind.lower()
    except Exception:
        return ""


def _num_tensorcores_per_chip():
    # Only v7x exposes two independent TensorCores to a Pallas "parallel" grid
    # axis; on single-core v5e/v6e splitting N just serializes + adds overhead.
    return 2 if "v7" in _tpu_device_kind() else 1


def _default_vmem_limit_bytes():
    cap = None
    try:
        cap = getattr(pltpu.get_tpu_info(), "vmem_capacity_bytes", None)
    except Exception:
        cap = None
    if not cap:
        cap = 64 * 1024 * 1024          # assume the smallest (v7x per-core VMEM)
    # leave headroom for compiler-internal scratch; cap at 96 MiB on 128 MiB parts
    return int(min(cap * 3 // 4, 96 * 1024 * 1024))


def _pick_t_tile(T, n_tile, F, H, A, *, feats_bytes, hstore_bytes,
                 budget_bytes, feats_buffers=2):
    """Largest divisor of T whose true (lane/sublane padded) VMEM footprint fits."""
    n8 = _round_up(n_tile, 8)
    F_p = _round_up(F, 128)
    H_p = _round_up(H, 128)
    A_p = _round_up(A, 128)

    # t_tile-independent residents: params (double-buffered, counted as f32 to
    # stay conservative), output blocks, small f32 scratch.
    fixed = 2 * (F_p * H_p + H_p * H_p + 8 * H_p + H_p * A_p + 8 * A_p) * 4
    fixed += 2 * (n8 * 128 + n8 * H_p) * 4          # per_env + h_fin output blocks
    fixed += (n8 * H_p + 2 * n8 * 128) * 4          # h_carry + lacc + wacc scratch

    def tile_bytes(tt):
        feats = feats_buffers * tt * n8 * F_p * feats_bytes   # streamed features
        mw = 2 * tt * n8 * 128 * 4                            # packed masks+weights (lane-padded)
        acts = 2 * tt * n8 * 128 * 4                          # actions (lane-padded)
        hst = tt * n8 * H_p * hstore_bytes                    # single-buffered scratch
        return feats + mw + acts + hst

    best = 1
    for cand in range(1, T + 1):
        if T % cand == 0 and fixed + tile_bytes(cand) <= budget_bytes:
            best = cand
    return best


# --------------------------------------------------------------------------- #
# Wrapper
# --------------------------------------------------------------------------- #
def il_agent_update(feats, actions, masks, weights, h0, params,
                    *, t_tile=None, n_tile=None, vmem_limit_bytes=None,
                    use_bf16=True, feats_buffers=2):
    T, N, F = feats.shape
    H = h0.shape[1]
    A = params["who"].shape[1]

    if n_tile is None:
        n_tile = N
        cores = _num_tensorcores_per_chip()
        if cores > 1 and N % cores == 0 and (N // cores) % 8 == 0:
            n_tile = N // cores       # split independent envs across v7x's 2 TCs

    assert N % n_tile == 0, "N must be divisible by n_tile"
    assert n_tile % 8 == 0, "n_tile must be a multiple of 8 (sublane alignment)"

    # bf16 only when the per-step (n_tile, H) slab is aligned to the bf16
    # sublane packing (16), so dynamic hstore indexing / leading-dim reshapes
    # stay tile-aligned. Otherwise fall back to the f32 path.
    use_bf16 = bool(use_bf16) and (n_tile % 16 == 0)
    mxu_dtype = jnp.bfloat16 if use_bf16 else jnp.float32
    hstore_dtype = mxu_dtype

    if vmem_limit_bytes is None:
        vmem_limit_bytes = _default_vmem_limit_bytes()

    if t_tile is None:
        t_tile = _pick_t_tile(
            T, n_tile, F, H, A,
            feats_bytes=jnp.dtype(mxu_dtype).itemsize,
            hstore_bytes=jnp.dtype(hstore_dtype).itemsize,
            budget_bytes=int(vmem_limit_bytes * 0.85),
            feats_buffers=feats_buffers)
    assert T % t_tile == 0, "T must be divisible by t_tile"

    # Input casts / packing (bf16 feats halves HBM traffic; packed masks+weights
    # is one DMA and one lane-padded VMEM block instead of two).
    feats_in = feats.astype(mxu_dtype)
    mw = jnp.concatenate(
        [masks.astype(jnp.float32), weights.astype(jnp.float32)], axis=-1)  # (T, N, 2)
    wxh = params["wxh"].astype(mxu_dtype)
    whh = params["whh"].astype(mxu_dtype)
    who = params["who"].astype(mxu_dtype)
    bh = params["bh"].astype(jnp.float32)
    bo = params["bo"].astype(jnp.float32)
    h0 = h0.astype(jnp.float32)
    actions = actions.astype(jnp.int32)

    grid = (N // n_tile, T // t_tile)   # (parallel env blocks, sequential time blocks)

    feat_kwargs = {}
    if feats_buffers != 2:
        feat_kwargs = dict(pipeline_mode=pl.Buffered(feats_buffers))
    feat_spec = pl.BlockSpec((t_tile, n_tile, F), lambda n, t: (t, n, 0), **feat_kwargs)
    act_spec = pl.BlockSpec((t_tile, n_tile, 1), lambda n, t: (t, n, 0))
    mw_spec = pl.BlockSpec((t_tile, n_tile, 2), lambda n, t: (t, n, 0))
    h0_spec = pl.BlockSpec((n_tile, H), lambda n, t: (n, 0))

    def p2(shape):
        return pl.BlockSpec(shape, lambda n, t: (0, 0))

    grid_spec = pltpu.PrefetchScalarGridSpec(
        num_scalar_prefetch=0,
        grid=grid,
        in_specs=[feat_spec, act_spec, mw_spec, h0_spec,
                  p2(wxh.shape), p2(whh.shape), p2(bh.shape),
                  p2(who.shape), p2(bo.shape)],
        out_specs=(pl.BlockSpec((n_tile, 1), lambda n, t: (n, 0)),
                   pl.BlockSpec((n_tile, H), lambda n, t: (n, 0))),
        scratch_shapes=[pltpu.VMEM((n_tile, H), jnp.float32),          # h carry (f32)
                        pltpu.VMEM((n_tile, 1), jnp.float32),          # weighted-loss acc
                        pltpu.VMEM((n_tile, 1), jnp.float32),          # weight acc
                        pltpu.VMEM((t_tile, n_tile, H), hstore_dtype)],  # xproj / h_t store
    )

    per_env, h_fin = pl.pallas_call(
        il_update_kernel,
        out_shape=(jax.ShapeDtypeStruct((N, 1), jnp.float32),
                   jax.ShapeDtypeStruct((N, H), jnp.float32)),
        grid_spec=grid_spec,
        compiler_params=pltpu.CompilerParams(
            dimension_semantics=("parallel", "arbitrary"),
            vmem_limit_bytes=int(vmem_limit_bytes)),
    )(feats_in, actions, mw, h0, wxh, whh, bh, who, bo)

    # Final mean over environments (tiny epilogue; per-env results may come from
    # different TensorCores on v7x, so the cross-env reduce lives in the wrapper).
    loss = jnp.mean(per_env)
    return loss, h_fin


# --------------------------------------------------------------------------- #
# Pure-JAX reference (correctness check)
# --------------------------------------------------------------------------- #
def reference_update(feats, actions, masks, weights, h0, params):
    def step(carry, inp):
        h, = carry
        x, a, m, w = inp
        h_in = h * m
        h_new = jnp.tanh(x @ params["wxh"] + h_in @ params["whh"] + params["bh"])
        logits = h_new @ params["who"] + params["bo"]
        log_p = jax.nn.log_softmax(logits, axis=-1)
        ce = -jnp.take_along_axis(log_p, a, axis=-1)       # (N, 1)
        return (h_new,), (ce, w)

    (h_fin,), (ce_all, w_all) = jax.lax.scan(
        step, (h0,), (feats, actions, masks, weights))
    loss = jnp.mean(jnp.sum(w_all * ce_all, axis=0) / jnp.sum(w_all, axis=0))
    return loss, h_fin


if __name__ == "__main__":
    T, N, F, H, A = 8, 16, 32, 32, 8   # seq, num_envs, feat dim, hidden, actions

    key = jax.random.PRNGKey(0)
    k = jax.random.split(key, 10)

    feats = jax.random.normal(k[0], (T, N, F), dtype=jnp.float32)
    actions = jax.random.randint(k[1], (T, N, 1), 0, A, dtype=jnp.int32)
    masks = (jax.random.uniform(k[2], (T, N, 1)) > 0.2).astype(jnp.float32)
    weights = jax.random.uniform(k[3], (T, N, 1), minval=0.5, maxval=1.5)
    h0 = jax.random.normal(k[4], (N, H), dtype=jnp.float32) * 0.1

    params = {
        "wxh": jax.random.normal(k[5], (F, H), dtype=jnp.float32) * 0.1,
        "whh": jax.random.normal(k[6], (H, H), dtype=jnp.float32) * 0.1,
        "bh":  jax.random.normal(k[7], (1, H), dtype=jnp.float32) * 0.01,
        "who": jax.random.normal(k[8], (H, A), dtype=jnp.float32) * 0.1,
        "bo":  jax.random.normal(k[9], (1, A), dtype=jnp.float32) * 0.01,
    }

    # t_tile=4 -> two time tiles: exercises the pipelined T tiling and the
    # carried hidden state / accumulators even at this toy size. n_tile /
    # bf16 / vmem budget are derived generation-aware by the wrapper.
    loss, h_fin = il_agent_update(feats, actions, masks, weights, h0, params,
                                  t_tile=4)
    jax.block_until_ready((loss, h_fin))

    loss_ref, h_ref = reference_update(feats, actions, masks, weights, h0, params)
    # bf16 MXU operands vs f32 reference -> loosened tolerances.
    assert jnp.allclose(loss, loss_ref, atol=3e-2, rtol=3e-2), (loss, loss_ref)
    assert jnp.allclose(h_fin, h_ref, atol=3e-2, rtol=3e-2)

    print("KERNEL_OK")
</pallas_src>

<mosaic_0001>
module attributes {stable_mosaic.version = 11 : i64} {
  func.func @il_update_kernel(%arg0: i32, %arg1: i32, %arg2: memref<4x16x32xbf16, #tpu.memory_space<vmem>>, %arg3: memref<4x16x1xi32, #tpu.memory_space<vmem>>, %arg4: memref<4x16x2xf32, #tpu.memory_space<vmem>>, %arg5: memref<16x32xf32, #tpu.memory_space<vmem>>, %arg6: memref<32x32xbf16, #tpu.memory_space<vmem>>, %arg7: memref<32x32xbf16, #tpu.memory_space<vmem>>, %arg8: memref<1x32xf32, #tpu.memory_space<vmem>>, %arg9: memref<32x8xbf16, #tpu.memory_space<vmem>>, %arg10: memref<1x8xf32, #tpu.memory_space<vmem>>, %arg11: memref<16x1xf32, #tpu.memory_space<vmem>>, %arg12: memref<16x32xf32, #tpu.memory_space<vmem>>, %arg13: memref<16x32xf32, #tpu.memory_space<vmem>>, %arg14: memref<16x1xf32, #tpu.memory_space<vmem>>, %arg15: memref<16x1xf32, #tpu.memory_space<vmem>>, %arg16: memref<4x16x32xbf16, #tpu.memory_space<vmem>>) attributes {dimension_semantics = [#tpu.dimension_semantics<parallel>, #tpu.dimension_semantics<arbitrary>], iteration_bounds = array<i64: 1, 2>, scalar_prefetch = 0 : i64, scratch_operands = 4 : i64, tpu.core_type = #tpu.core_type<tc>, window_params = [{transform_indices = @transform_0, window_bounds = array<i64: 4, 16, 32>}, {transform_indices = @transform_1, window_bounds = array<i64: 4, 16, 1>}, {transform_indices = @transform_2, window_bounds = array<i64: 4, 16, 2>}, {transform_indices = @transform_3, window_bounds = array<i64: 16, 32>}, {pipeline_mode = #tpu.pipeline_mode<synchronous>, transform_indices = @transform_4, window_bounds = array<i64: 32, 32>}, {pipeline_mode = #tpu.pipeline_mode<synchronous>, transform_indices = @transform_5, window_bounds = array<i64: 32, 32>}, {pipeline_mode = #tpu.pipeline_mode<synchronous>, transform_indices = @transform_6, window_bounds = array<i64: 1, 32>}, {pipeline_mode = #tpu.pipeline_mode<synchronous>, transform_indices = @transform_7, window_bounds = array<i64: 32, 8>}, {pipeline_mode = #tpu.pipeline_mode<synchronous>, transform_indices = @transform_8, window_bounds = array<i64: 1, 8>}, {transform_indices = @transform_9, window_bounds = array<i64: 16, 1>}, {transform_indices = @transform_10, window_bounds = array<i64: 16, 32>}]} {
    %c0_i32 = arith.constant 0 : i32
    %0 = arith.cmpi eq, %arg1, %c0_i32 : i32
    %1 = arith.extui %0 : i1 to i32
    %c0_i32_0 = arith.constant 0 : i32
    %2 = arith.cmpi ne, %1, %c0_i32_0 : i32
    scf.if %2 {
      %c0_75 = arith.constant 0 : index
      %c0_76 = arith.constant 0 : index
      %133 = vector.load %arg5[%c0_75, %c0_76] : memref<16x32xf32, #tpu.memory_space<vmem>>, vector<16x32xf32>
      %c0_77 = arith.constant 0 : index
      %c0_78 = arith.constant 0 : index
      %134 = vector.load %arg13[%c0_77, %c0_78] : memref<16x32xf32, #tpu.memory_space<vmem>>, vector<16x32xf32>
      tpu.vector_store %arg13[%c0_77, %c0_78], %133 {strides = array<i32>} : memref<16x32xf32, #tpu.memory_space<vmem>>, vector<16x32xf32>,
      %cst_79 = arith.constant 0.000000e+00 : f32
      %135 = vector.broadcast %cst_79 : f32 to vector<16x1xf32>
      %c0_80 = arith.constant 0 : index
      %c0_81 = arith.constant 0 : index
      %136 = vector.load %arg14[%c0_80, %c0_81] : memref<16x1xf32, #tpu.memory_space<vmem>>, vector<16x1xf32>
      tpu.vector_store %arg14[%c0_80, %c0_81], %135 {strides = array<i32>} : memref<16x1xf32, #tpu.memory_space<vmem>>, vector<16x1xf32>,
      %cst_82 = arith.constant 0.000000e+00 : f32
      %137 = vector.broadcast %cst_82 : f32 to vector<16x1xf32>
      %c0_83 = arith.constant 0 : index
      %c0_84 = arith.constant 0 : index
      %138 = vector.load %arg15[%c0_83, %c0_84] : memref<16x1xf32, #tpu.memory_space<vmem>>, vector<16x1xf32>
      tpu.vector_store %arg15[%c0_83, %c0_84], %137 {strides = array<i32>} : memref<16x1xf32, #tpu.memory_space<vmem>>, vector<16x1xf32>,
    } else {
    }
    %c0 = arith.constant 0 : index
    %c0_1 = arith.constant 0 : index
    %3 = vector.load %arg6[%c0, %c0_1] : memref<32x32xbf16, #tpu.memory_space<vmem>>, vector<32x32xbf16>
    %c0_2 = arith.constant 0 : index
    %c0_3 = arith.constant 0 : index
    %4 = vector.load %arg7[%c0_2, %c0_3] : memref<32x32xbf16, #tpu.memory_space<vmem>>, vector<32x32xbf16>
    %c0_4 = arith.constant 0 : index
    %c0_5 = arith.constant 0 : index
    %5 = vector.load %arg8[%c0_4, %c0_5] : memref<1x32xf32, #tpu.memory_space<vmem>>, vector<1x32xf32>
    %c0_6 = arith.constant 0 : index
    %c0_7 = arith.constant 0 : index
    %6 = vector.load %arg9[%c0_6, %c0_7] : memref<32x8xbf16, #tpu.memory_space<vmem>>, vector<32x8xbf16>
    %c0_8 = arith.constant 0 : index
    %c0_9 = arith.constant 0 : index
    %7 = vector.load %arg10[%c0_8, %c0_9] : memref<1x8xf32, #tpu.memory_space<vmem>>, vector<1x8xf32>
    %c0_10 = arith.constant 0 : index
    %c0_11 = arith.constant 0 : index
    %c0_12 = arith.constant 0 : index
    %8 = vector.load %arg2[%c0_10, %c0_11, %c0_12] : memref<4x16x32xbf16, #tpu.memory_space<vmem>>, vector<4x16x32xbf16>
    %9 = vector.shape_cast %8 : vector<4x16x32xbf16> to vector<64x32xbf16>
    %cst = arith.constant dense<0.000000e+00> : vector<64x32xf32>
    %10 = tpu.matmul %9, %3, %cst {dimension_numbers = #tpu.dot_dimension_numbers<[1], [0], [0], [1], [0, 0, 1, 1], [], []>} : vector<64x32xbf16>, vector<32x32xbf16>, vector<64x32xf32> -> vector<64x32xf32>
    %11 = vector.broadcast %5 : vector<1x32xf32> to vector<64x32xf32>
    %12 = arith.addf %10, %11 : vector<64x32xf32>
    %13 = vector.shape_cast %12 : vector<64x32xf32> to vector<4x16x32xf32>
    %14 = arith.truncf %13 : vector<4x16x32xf32> to vector<4x16x32xbf16>
    %c0_13 = arith.constant 0 : index
    %c0_14 = arith.constant 0 : index
    %c0_15 = arith.constant 0 : index
    %15 = vector.load %arg16[%c0_13, %c0_14, %c0_15] : memref<4x16x32xbf16, #tpu.memory_space<vmem>>, vector<4x16x32xbf16>
    tpu.vector_store %arg16[%c0_13, %c0_14, %c0_15], %14 {strides = array<i32>} : memref<4x16x32xbf16, #tpu.memory_space<vmem>>, vector<4x16x32xbf16>,
    %c0_16 = arith.constant 0 : index
    %c0_17 = arith.constant 0 : index
    %16 = vector.load %arg13[%c0_16, %c0_17] : memref<16x32xf32, #tpu.memory_space<vmem>>, vector<16x32xf32>
    %c0_i32_18 = arith.constant 0 : i32
    %17 = arith.index_cast %c0_i32_18 : i32 to index
    %c0_19 = arith.constant 0 : index
    %c0_20 = arith.constant 0 : index
    %18 = vector.load %arg4[%17, %c0_19, %c0_20] : memref<4x16x2xf32, #tpu.memory_space<vmem>>, vector<1x16x2xf32>
    %19 = vector.shape_cast %18 : vector<1x16x2xf32> to vector<16x2xf32>
    %20 = vector.extract_strided_slice %19 {offsets = [0, 0], sizes = [16, 1], strides = [1, 1]} : vector<16x2xf32> to vector<16x1xf32>
    %21 = vector.broadcast %20 : vector<16x1xf32> to vector<16x32xf32>
    %22 = arith.mulf %16, %21 : vector<16x32xf32>
    %23 = arith.truncf %22 : vector<16x32xf32> to vector<16x32xbf16>
    %24 = arith.index_cast %c0_i32_18 : i32 to index
    %c0_21 = arith.constant 0 : index
    %c0_22 = arith.constant 0 : index
    %25 = vector.load %arg16[%24, %c0_21, %c0_22] : memref<4x16x32xbf16, #tpu.memory_space<vmem>>, vector<1x16x32xbf16>
    %26 = vector.shape_cast %25 : vector<1x16x32xbf16> to vector<16x32xbf16>
    %27 = arith.extf %26 : vector<16x32xbf16> to vector<16x32xf32>
    %cst_23 = arith.constant dense<0.000000e+00> : vector<16x32xf32>
    %28 = tpu.matmul %23, %4, %cst_23 {dimension_numbers = #tpu.dot_dimension_numbers<[1], [0], [0], [1], [0, 0, 1, 1], [], []>} : vector<16x32xbf16>, vector<32x32xbf16>, vector<16x32xf32> -> vector<16x32xf32>
    %29 = arith.addf %27, %28 : vector<16x32xf32>
    %30 = math.tanh %29 : vector<16x32xf32>
    %31 = arith.truncf %30 : vector<16x32xf32> to vector<16x32xbf16>
    %32 = arith.index_cast %c0_i32_18 : i32 to index
    %c0_24 = arith.constant 0 : index
    %c0_25 = arith.constant 0 : index
    %33 = vector.load %arg16[%32, %c0_24, %c0_25] : memref<4x16x32xbf16, #tpu.memory_space<vmem>>, vector<1x16x32xbf16>
    %34 = vector.shape_cast %33 : vector<1x16x32xbf16> to vector<16x32xbf16>
    %35 = vector.shape_cast %31 : vector<16x32xbf16> to vector<1x16x32xbf16>
    tpu.vector_store %arg16[%32, %c0_24, %c0_25], %35 {strides = array<i32>} : memref<4x16x32xbf16, #tpu.memory_space<vmem>>, vector<1x16x32xbf16>,
    %c1_i32 = arith.constant 1 : i32
    %36 = arith.index_cast %c1_i32 : i32 to index
    %c0_26 = arith.constant 0 : index
    %c0_27 = arith.constant 0 : index
    %37 = vector.load %arg4[%36, %c0_26, %c0_27] : memref<4x16x2xf32, #tpu.memory_space<vmem>>, vector<1x16x2xf32>
    %38 = vector.shape_cast %37 : vector<1x16x2xf32> to vector<16x2xf32>
    %39 = vector.extract_strided_slice %38 {offsets = [0, 0], sizes = [16, 1], strides = [1, 1]} : vector<16x2xf32> to vector<16x1xf32>
    %40 = vector.broadcast %39 : vector<16x1xf32> to vector<16x32xf32>
    %41 = arith.mulf %30, %40 : vector<16x32xf32>
    %42 = arith.truncf %41 : vector<16x32xf32> to vector<16x32xbf16>
    %43 = arith.index_cast %c1_i32 : i32 to index
    %c0_28 = arith.constant 0 : index
    %c0_29 = arith.constant 0 : index
    %44 = vector.load %arg16[%43, %c0_28, %c0_29] : memref<4x16x32xbf16, #tpu.memory_space<vmem>>, vector<1x16x32xbf16>
    %45 = vector.shape_cast %44 : vector<1x16x32xbf16> to vector<16x32xbf16>
    %46 = arith.extf %45 : vector<16x32xbf16> to vector<16x32xf32>
    %cst_30 = arith.constant dense<0.000000e+00> : vector<16x32xf32>
    %47 = tpu.matmul %42, %4, %cst_30 {dimension_numbers = #tpu.dot_dimension_numbers<[1], [0], [0], [1], [0, 0, 1, 1], [], []>} : vector<16x32xbf16>, vector<32x32xbf16>, vector<16x32xf32> -> vector<16x32xf32>
    %48 = arith.addf %46, %47 : vector<16x32xf32>
    %49 = math.tanh %48 : vector<16x32xf32>
    %50 = arith.truncf %49 : vector<16x32xf32> to vector<16x32xbf16>
    %51 = arith.index_cast %c1_i32 : i32 to index
    %c0_31 = arith.constant 0 : index
    %c0_32 = arith.constant 0 : index
    %52 = vector.load %arg16[%51, %c0_31, %c0_32] : memref<4x16x32xbf16, #tpu.memory_space<vmem>>, vector<1x16x32xbf16>
    %53 = vector.shape_cast %52 : vector<1x16x32xbf16> to vector<16x32xbf16>
    %54 = vector.shape_cast %50 : vector<16x32xbf16> to vector<1x16x32xbf16>
    tpu.vector_store %arg16[%51, %c0_31, %c0_32], %54 {strides = array<i32>} : memref<4x16x32xbf16, #tpu.memory_space<vmem>>, vector<1x16x32xbf16>,
    %c2_i32 = arith.constant 2 : i32
    %55 = arith.index_cast %c2_i32 : i32 to index
    %c0_33 = arith.constant 0 : index
    %c0_34 = arith.constant 0 : index
    %56 = vector.load %arg4[%55, %c0_33, %c0_34] : memref<4x16x2xf32, #tpu.memory_space<vmem>>, vector<1x16x2xf32>
    %57 = vector.shape_cast %56 : vector<1x16x2xf32> to vector<16x2xf32>
    %58 = vector.extract_strided_slice %57 {offsets = [0, 0], sizes = [16, 1], strides = [1, 1]} : vector<16x2xf32> to vector<16x1xf32>
    %59 = vector.broadcast %58 : vector<16x1xf32> to vector<16x32xf32>
    %60 = arith.mulf %49, %59 : vector<16x32xf32>
    %61 = arith.truncf %60 : vector<16x32xf32> to vector<16x32xbf16>
    %62 = arith.index_cast %c2_i32 : i32 to index
    %c0_35 = arith.constant 0 : index
    %c0_36 = arith.constant 0 : index
    %63 = vector.load %arg16[%62, %c0_35, %c0_36] : memref<4x16x32xbf16, #tpu.memory_space<vmem>>, vector<1x16x32xbf16>
    %64 = vector.shape_cast %63 : vector<1x16x32xbf16> to vector<16x32xbf16>
    %65 = arith.extf %64 : vector<16x32xbf16> to vector<16x32xf32>
    %cst_37 = arith.constant dense<0.000000e+00> : vector<16x32xf32>
    %66 = tpu.matmul %61, %4, %cst_37 {dimension_numbers = #tpu.dot_dimension_numbers<[1], [0], [0], [1], [0, 0, 1, 1], [], []>} : vector<16x32xbf16>, vector<32x32xbf16>, vector<16x32xf32> -> vector<16x32xf32>
    %67 = arith.addf %65, %66 : vector<16x32xf32>
    %68 = math.tanh %67 : vector<16x32xf32>
    %69 = arith.truncf %68 : vector<16x32xf32> to vector<16x32xbf16>
    %70 = arith.index_cast %c2_i32 : i32 to index
    %c0_38 = arith.constant 0 : index
    %c0_39 = arith.constant 0 : index
    %71 = vector.load %arg16[%70, %c0_38, %c0_39] : memref<4x16x32xbf16, #tpu.memory_space<vmem>>, vector<1x16x32xbf16>
    %72 = vector.shape_cast %71 : vector<1x16x32xbf16> to vector<16x32xbf16>
    %73 = vector.shape_cast %69 : vector<16x32xbf16> to vector<1x16x32xbf16>
    tpu.vector_store %arg16[%70, %c0_38, %c0_39], %73 {strides = array<i32>} : memref<4x16x32xbf16, #tpu.memory_space<vmem>>, vector<1x16x32xbf16>,
    %c3_i32 = arith.constant 3 : i32
    %74 = arith.index_cast %c3_i32 : i32 to index
    %c0_40 = arith.constant 0 : index
    %c0_41 = arith.constant 0 : index
    %75 = vector.load %arg4[%74, %c0_40, %c0_41] : memref<4x16x2xf32, #tpu.memory_space<vmem>>, vector<1x16x2xf32>
    %76 = vector.shape_cast %75 : vector<1x16x2xf32> to vector<16x2xf32>
    %77 = vector.extract_strided_slice %76 {offsets = [0, 0], sizes = [16, 1], strides = [1, 1]} : vector<16x2xf32> to vector<16x1xf32>
    %78 = vector.broadcast %77 : vector<16x1xf32> to vector<16x32xf32>
    %79 = arith.mulf %68, %78 : vector<16x32xf32>
    %80 = arith.truncf %79 : vector<16x32xf32> to vector<16x32xbf16>
    %81 = arith.index_cast %c3_i32 : i32 to index
    %c0_42 = arith.constant 0 : index
    %c0_43 = arith.constant 0 : index
    %82 = vector.load %arg16[%81, %c0_42, %c0_43] : memref<4x16x32xbf16, #tpu.memory_space<vmem>>, vector<1x16x32xbf16>
    %83 = vector.shape_cast %82 : vector<1x16x32xbf16> to vector<16x32xbf16>
    %84 = arith.extf %83 : vector<16x32xbf16> to vector<16x32xf32>
    %cst_44 = arith.constant dense<0.000000e+00> : vector<16x32xf32>
    %85 = tpu.matmul %80, %4, %cst_44 {dimension_numbers = #tpu.dot_dimension_numbers<[1], [0], [0], [1], [0, 0, 1, 1], [], []>} : vector<16x32xbf16>, vector<32x32xbf16>, vector<16x32xf32> -> vector<16x32xf32>
    %86 = arith.addf %84, %85 : vector<16x32xf32>
    %87 = math.tanh %86 : vector<16x32xf32>
    %88 = arith.truncf %87 : vector<16x32xf32> to vector<16x32xbf16>
    %89 = arith.index_cast %c3_i32 : i32 to index
    %c0_45 = arith.constant 0 : index
    %c0_46 = arith.constant 0 : index
    %90 = vector.load %arg16[%89, %c0_45, %c0_46] : memref<4x16x32xbf16, #tpu.memory_space<vmem>>, vector<1x16x32xbf16>
    %91 = vector.shape_cast %90 : vector<1x16x32xbf16> to vector<16x32xbf16>
    %92 = vector.shape_cast %88 : vector<16x32xbf16> to vector<1x16x32xbf16>
    tpu.vector_store %arg16[%89, %c0_45, %c0_46], %92 {strides = array<i32>} : memref<4x16x32xbf16, #tpu.memory_space<vmem>>, vector<1x16x32xbf16>,
    %c4_i32 = arith.constant 4 : i32
    %c0_47 = arith.constant 0 : index
    %c0_48 = arith.constant 0 : index
    %93 = vector.load %arg13[%c0_47, %c0_48] : memref<16x32xf32, #tpu.memory_space<vmem>>, vector<16x32xf32>
    tpu.vector_store %arg13[%c0_47, %c0_48], %87 {strides = array<i32>} : memref<16x32xf32, #tpu.memory_space<vmem>>, vector<16x32xf32>,
    %c0_49 = arith.constant 0 : index
    %c0_50 = arith.constant 0 : index
    %c0_51 = arith.constant 0 : index
    %94 = vector.load %arg16[%c0_49, %c0_50, %c0_51] : memref<4x16x32xbf16, #tpu.memory_space<vmem>>, vector<4x16x32xbf16>
    %95 = vector.shape_cast %94 : vector<4x16x32xbf16> to vector<64x32xbf16>
    %cst_52 = arith.constant dense<0.000000e+00> : vector<64x8xf32>
    %96 = tpu.matmul %95, %6, %cst_52 {dimension_numbers = #tpu.dot_dimension_numbers<[1], [0], [0], [1], [0, 0, 1, 1], [], []>} : vector<64x32xbf16>, vector<32x8xbf16>, vector<64x8xf32> -> vector<64x8xf32>
    %97 = vector.broadcast %7 : vector<1x8xf32> to vector<64x8xf32>
    %98 = arith.addf %96, %97 : vector<64x8xf32>
    %cst_53 = arith.constant dense<0xFF800000> : vector<64xf32>
    %99 = vector.multi_reduction <maximumf>, %98, %cst_53 [1] : vector<64x8xf32> to vector<64xf32>
    %100 = vector.shape_cast %99 : vector<64xf32> to vector<64x1xf32>
    %101 = vector.broadcast %100 : vector<64x1xf32> to vector<64x8xf32>
    %102 = arith.subf %98, %101 : vector<64x8xf32>
    %103 = math.exp %102 : vector<64x8xf32>
    %cst_54 = arith.constant dense<0.000000e+00> : vector<64xf32>
    %104 = vector.multi_reduction <add>, %103, %cst_54 [1] : vector<64x8xf32> to vector<64xf32>
    %105 = vector.shape_cast %104 : vector<64xf32> to vector<64x1xf32>
    %106 = math.log %105 : vector<64x1xf32>
    %107 = arith.addf %100, %106 : vector<64x1xf32>
    %c0_55 = arith.constant 0 : index
    %c0_56 = arith.constant 0 : index
    %c0_57 = arith.constant 0 : index
    %108 = vector.load %arg3[%c0_55, %c0_56, %c0_57] : memref<4x16x1xi32, #tpu.memory_space<vmem>>, vector<4x16x1xi32>
    %109 = vector.shape_cast %108 : vector<4x16x1xi32> to vector<64x1xi32>
    %110 = tpu.iota {dimensions = array<i32: 1>} : vector<64x8xi32>
    %111 = vector.broadcast %109 : vector<64x1xi32> to vector<64x8xi32>
    %112 = arith.cmpi eq, %110, %111 : vector<64x8xi32>
    %cst_58 = arith.constant 0.000000e+00 : f32
    %113 = vector.broadcast %cst_58 : f32 to vector<64x8xf32>
    %114 = arith.select %112, %98, %113 : vector<64x8xi1>, vector<64x8xf32>
    %cst_59 = arith.constant dense<0.000000e+00> : vector<64xf32>
    %115 = vector.multi_reduction <add>, %114, %cst_59 [1] : vector<64x8xf32> to vector<64xf32>
    %116 = vector.shape_cast %115 : vector<64xf32> to vector<64x1xf32>
    %117 = arith.subf %107, %116 : vector<64x1xf32>
    %118 = vector.shape_cast %117 : vector<64x1xf32> to vector<4x16x1xf32>
    %c0_60 = arith.constant 0 : index
    %c0_61 = arith.constant 0 : index
    %c0_62 = arith.constant 0 : index
    %119 = vector.load %arg4[%c0_60, %c0_61, %c0_62] : memref<4x16x2xf32, #tpu.memory_space<vmem>>, vector<4x16x2xf32>
    %120 = vector.extract_strided_slice %119 {offsets = [0, 0, 1], sizes = [4, 16, 1], strides = [1, 1, 1]} : vector<4x16x2xf32> to vector<4x16x1xf32>
    %c0_63 = arith.constant 0 : index
    %c0_64 = arith.constant 0 : index
    %121 = vector.load %arg14[%c0_63, %c0_64] : memref<16x1xf32, #tpu.memory_space<vmem>>, vector<16x1xf32>
    %122 = arith.mulf %120, %118 : vector<4x16x1xf32>
    %cst_65 = arith.constant dense<0.000000e+00> : vector<16x1xf32>
    %123 = vector.multi_reduction <add>, %122, %cst_65 [0] : vector<4x16x1xf32> to vector<16x1xf32>
    %124 = arith.addf %121, %123 : vector<16x1xf32>
    %c0_66 = arith.constant 0 : index
    %c0_67 = arith.constant 0 : index
    %125 = vector.load %arg14[%c0_66, %c0_67] : memref<16x1xf32, #tpu.memory_space<vmem>>, vector<16x1xf32>
    tpu.vector_store %arg14[%c0_66, %c0_67], %124 {strides = array<i32>} : memref<16x1xf32, #tpu.memory_space<vmem>>, vector<16x1xf32>,
    %c0_68 = arith.constant 0 : index
    %c0_69 = arith.constant 0 : index
    %126 = vector.load %arg15[%c0_68, %c0_69] : memref<16x1xf32, #tpu.memory_space<vmem>>, vector<16x1xf32>
    %cst_70 = arith.constant dense<0.000000e+00> : vector<16x1xf32>
    %127 = vector.multi_reduction <add>, %120, %cst_70 [0] : vector<4x16x1xf32> to vector<16x1xf32>
    %128 = arith.addf %126, %127 : vector<16x1xf32>
    %c0_71 = arith.constant 0 : index
    %c0_72 = arith.constant 0 : index
    %129 = vector.load %arg15[%c0_71, %c0_72] : memref<16x1xf32, #tpu.memory_space<vmem>>, vector<16x1xf32>
    tpu.vector_store %arg15[%c0_71, %c0_72], %128 {strides = array<i32>} : memref<16x1xf32, #tpu.memory_space<vmem>>, vector<16x1xf32>,
    %c1_i32_73 = arith.constant 1 : i32
    %130 = arith.cmpi eq, %arg1, %c1_i32_73 : i32
    %131 = arith.extui %130 : i1 to i32
    %c0_i32_74 = arith.constant 0 : i32
    %132 = arith.cmpi ne, %131, %c0_i32_74 : i32
    scf.if %132 {
      %c0_75 = arith.constant 0 : index
      %c0_76 = arith.constant 0 : index
      %133 = vector.load %arg14[%c0_75, %c0_76] : memref<16x1xf32, #tpu.memory_space<vmem>>, vector<16x1xf32>
      %c0_77 = arith.constant 0 : index
      %c0_78 = arith.constant 0 : index
      %134 = vector.load %arg15[%c0_77, %c0_78] : memref<16x1xf32, #tpu.memory_space<vmem>>, vector<16x1xf32>
      %135 = arith.divf %133, %134 : vector<16x1xf32>
      %c0_79 = arith.constant 0 : index
      %c0_80 = arith.constant 0 : index
      %136 = vector.load %arg11[%c0_79, %c0_80] : memref<16x1xf32, #tpu.memory_space<vmem>>, vector<16x1xf32>
      tpu.vector_store %arg11[%c0_79, %c0_80], %135 {strides = array<i32>} : memref<16x1xf32, #tpu.memory_space<vmem>>, vector<16x1xf32>,
      %c0_81 = arith.constant 0 : index
      %c0_82 = arith.constant 0 : index
      %137 = vector.load %arg13[%c0_81, %c0_82] : memref<16x32xf32, #tpu.memory_space<vmem>>, vector<16x32xf32>
      %c0_83 = arith.constant 0 : index
      %c0_84 = arith.constant 0 : index
      %138 = vector.load %arg12[%c0_83, %c0_84] : memref<16x32xf32, #tpu.memory_space<vmem>>, vector<16x32xf32>
      tpu.vector_store %arg12[%c0_83, %c0_84], %137 {strides = array<i32>} : memref<16x32xf32, #tpu.memory_space<vmem>>, vector<16x32xf32>,
    } else {
    }
    return
  }
  func.func @transform_0(%arg0: i32, %arg1: i32) -> (i32, i32, i32) {
    %c0_i32 = arith.constant 0 : i32
    %c0_i32_0 = arith.constant 0 : i32
    return %arg1, %arg0, %c0_i32 : i32, i32, i32
  }
  func.func @transform_1(%arg0: i32, %arg1: i32) -> (i32, i32, i32) {
    %c0_i32 = arith.constant 0 : i32
    %c0_i32_0 = arith.constant 0 : i32
    return %arg1, %arg0, %c0_i32 : i32, i32, i32
  }
  func.func @transform_2(%arg0: i32, %arg1: i32) -> (i32, i32, i32) {
    %c0_i32 = arith.constant 0 : i32
    %c0_i32_0 = arith.constant 0 : i32
    return %arg1, %arg0, %c0_i32 : i32, i32, i32
  }
  func.func @transform_3(%arg0: i32, %arg1: i32) -> (i32, i32) {
    %c0_i32 = arith.constant 0 : i32
    %c0_i32_0 = arith.constant 0 : i32
    return %arg0, %c0_i32 : i32, i32
  }
  func.func @transform_4(%arg0: i32, %arg1: i32) -> (i32, i32) {
    %c0_i32 = arith.constant 0 : i32
    %c0_i32_0 = arith.constant 0 : i32
    %c0_i32_1 = arith.constant 0 : i32
    return %c0_i32, %c0_i32_0 : i32, i32
  }
  func.func @transform_5(%arg0: i32, %arg1: i32) -> (i32, i32) {
    %c0_i32 = arith.constant 0 : i32
    %c0_i32_0 = arith.constant 0 : i32
    %c0_i32_1 = arith.constant 0 : i32
    return %c0_i32, %c0_i32_0 : i32, i32
  }
  func.func @transform_6(%arg0: i32, %arg1: i32) -> (i32, i32) {
    %c0_i32 = arith.constant 0 : i32
    %c0_i32_0 = arith.constant 0 : i32
    %c0_i32_1 = arith.constant 0 : i32
    return %c0_i32, %c0_i32_0 : i32, i32
  }
  func.func @transform_7(%arg0: i32, %arg1: i32) -> (i32, i32) {
    %c0_i32 = arith.constant 0 : i32
    %c0_i32_0 = arith.constant 0 : i32
    %c0_i32_1 = arith.constant 0 : i32
    return %c0_i32, %c0_i32_0 : i32, i32
  }
  func.func @transform_8(%arg0: i32, %arg1: i32) -> (i32, i32) {
    %c0_i32 = arith.constant 0 : i32
    %c0_i32_0 = arith.constant 0 : i32
    %c0_i32_1 = arith.constant 0 : i32
    return %c0_i32, %c0_i32_0 : i32, i32
  }
  func.func @transform_9(%arg0: i32, %arg1: i32) -> (i32, i32) {
    %c0_i32 = arith.constant 0 : i32
    %c0_i32_0 = arith.constant 0 : i32
    return %arg0, %c0_i32 : i32, i32
  }
  func.func @transform_10(%arg0: i32, %arg1: i32) -> (i32, i32) {
    %c0_i32 = arith.constant 0 : i32
    %c0_i32_0 = arith.constant 0 : i32
    return %arg0, %c0_i32 : i32, i32
  }
}

</mosaic_0001>

<llo_original>
// kernel: tpu_custom_call.1
$region0: #{tpu_custom_call.1}
  #allocation0 [shape = 'u32[]', space=smem, size = 0x4, offset = 0x4, fixed_abs, tag = 'smem constant byte address 0x4 - core index']
  #allocation1 [shape = 'u32[144,128]{1,0:T(1,128)}', space=vmem, size = 0x12000, scoped, tag = 'internal scratch']
  #allocation2 [shape = 'f32[16,32]{1,0:T(8,128)}', space=vmem, size = 0x2000, scoped, tag = 'scratch operand']
  #allocation3 [shape = 'f32[16,1]{1,0:T(8,128)}', space=vmem, size = 0x2000, scoped, tag = 'scratch operand']
  #allocation4 [shape = 'f32[16,1]{1,0:T(8,128)}', space=vmem, size = 0x2000, scoped, tag = 'scratch operand']
  #allocation5 [shape = 'bf16[4,16,32]{2,1,0:T(8,128)(2,1)}', space=vmem, size = 0x4000, scoped, tag = 'scratch operand']
  %s0 = inlined_call_operand.vmem [shape: bf16[8,16,32], index: 0, kind: input, shape index: {}]
  %s1 = inlined_call_operand.vmem [shape: s32[8,16,1], index: 1, kind: input, shape index: {}]
  %s2 = inlined_call_operand.vmem [shape: f32[8,16,2], index: 2, kind: input, shape index: {}]
  %s3 = inlined_call_operand.vmem [shape: f32[16,32], index: 3, kind: input, shape index: {}]
  %s4 = inlined_call_operand.vmem [shape: bf16[32,32], index: 4, kind: input, shape index: {}]
  %s5 = inlined_call_operand.vmem [shape: bf16[32,32], index: 5, kind: input, shape index: {}]
  %s6 = inlined_call_operand.vmem [shape: f32[1,32], index: 6, kind: input, shape index: {}]
  %s7 = inlined_call_operand.vmem [shape: bf16[32,8], index: 7, kind: input, shape index: {}]
  %s8 = inlined_call_operand.vmem [shape: f32[1,8], index: 8, kind: input, shape index: {}]
  %s9 = inlined_call_operand.vmem [shape: f32[16,1], index: 9, kind: output, shape index: {0}]
  %s10 = inlined_call_operand.hbm [shape: f32[16,32], index: 10, kind: output, shape index: {1}]
  %11 = xla_tuple %s9, %s10
  %s12 = sld [smem:[#allocation0]]
  $region85: #{tpu_custom_call.1} parent=0
    _
  %s14 = ssub.s32 1, %s12
  %s15 = scalar_select 0, %s14, %s12
  $region1: #{tpu_custom_call.1} parent=0
    #allocation6 [shape = 'u8[8192]{0}', space=vmem, size = 0x2000, scoped, tag = 'output window, operand 1, single buffered']
    #allocation7 [shape = 's32[2]{0}', space=sflag, size = 0x8, scoped, tag = 'scoped memory for tpu_custom_call.1']
    %16 = vsyncpa [#allocation7], 0
    loop: start=0, step=1, limit=4
    $region2: #{tpu_custom_call.1} parent=1 // loop_pre_header
      _
    $region3: #{tpu_custom_call.1} parent=1 // loop_header
      %s18 = sphi 0, %s22
      %p19 = scmp.ge.s32.totalorder %s18, 4
      %s25 = sphi 0, %s37
      %s26 = sphi 0, %s33
      %s27 = sphi 0, %s25
      %s28 = sphi 0, %s26
      %s29 = sphi 0, %s27
      %s30 = sphi 0, %s28
      %s42 = sphi 0, %s44
      %s45 = sphi 0, %s42
      %s46 = sphi 0, %s45
      %s62 = sphi 0, %s46
      %s70 = sphi 0, %s72
      %s73 = sphi 0, %s70
      %s74 = sphi 0, %s73
      %s90 = sphi 0, %s74
      %s98 = sphi 0, %s100
      %s101 = sphi 0, %s98
      %s102 = sphi 0, %s101
      %s118 = sphi 0, %s102
      %s124 = sphi 0, %s126
      %s127 = sphi 0, %s124
      %s128 = sphi 0, %s127
      %s144 = sphi 0, %s128
      %s148 = sphi 0, %s148
      %s150 = sphi 0, %s148
      %s151 = sphi 0, %s150
      %s165 = sphi 0, %s151
      %s169 = sphi 0, %s169
      %s171 = sphi 0, %s169
      %s172 = sphi 0, %s171
      %s186 = sphi 0, %s172
      %s190 = sphi 0, %s190
      %s192 = sphi 0, %s190
      %s193 = sphi 0, %s192
      %s207 = sphi 0, %s193
      %s211 = sphi 0, %s211
      %s213 = sphi 0, %s211
      %s214 = sphi 0, %s213
      %s228 = sphi 0, %s214
      %s232 = sphi 0, %s232
      %s234 = sphi 0, %s232
      %s235 = sphi 0, %s234
      %s249 = sphi 0, %s235
      %s255 = sphi 0, %s257
      %s258 = sphi 0, %s255
      %s259 = sphi 0, %s258
      %s275 = sphi 0, %s259
      %s281 = sphi 0, %s283
      %s284 = sphi 0, %s281
      %s285 = sphi 0, %s284
      %s301 = sphi 0, %s285
    $region4: #{tpu_custom_call.1} parent=1 // loop_header_branch
      %21 = sbr.rel (%p19) target = $region8
    $region5: #{tpu_custom_call.1} parent=1 // loop_body
      %s23 = ssub.s32 %s18, 1
      %s24 = ssub.s32 %s18, 2
      %s31 = sadd.s32 1, %s26
      %p32 = scmp.ge.s32.totalorder %s31, 2
      %s33 = scalar_select %p32, 0, %s31
      %s34 = sadd.s32 1, %s25
      %s35 = scalar_select %p32, %s34, %s25
      %p36 = scmp.ge.s32.totalorder %s35, 1
      %s37 = scalar_select %p36, 0, %s35
      %s38 = ssub.s32 %s26, %s33
      %s39 = ssub.s32 %s25, %s37
      %s40 = sor.u32 %s38, %s39
      %p41 = scmp.eq.s32.totalorder %s40, 0
      %s43 = sadd.s32 %s42, 1
      %s44 = scalar_select %p41, %s42, %s43
      %p47 = pneg %p41
      %p48 = scmp.eq.s32.totalorder %s18, 1
      %p49 = por %p47, %p48
      %p50 = scmp.ne.s32.totalorder %s42, %s45
      %p51 = scmp.eq.s32.totalorder %s18, 0
      %p52 = por %p50, %p51
      %p53 = scmp.ne.s32.totalorder %s42, %s45
      %p54 = scmp.eq.s32.totalorder %s23, 1
      %p55 = por %p53, %p54
      %p56 = scmp.ne.s32.totalorder %s45, %s46
      %p57 = scmp.eq.s32.totalorder %s23, 0
      %p58 = por %p56, %p57
      %p59 = scmp.ne.s32.totalorder %s45, %s46
      %p60 = scmp.eq.s32.totalorder %s24, 1
      %p61 = por %p59, %p60
      %p63 = scmp.ne.s32.totalorder %s46, %s62
      %p64 = scmp.eq.s32.totalorder %s24, 0
      %p65 = por %p63, %p64
      %s66 = ssub.s32 %s26, %s33
      %s67 = ssub.s32 %s25, %s37
      %s68 = sor.u32 %s66, %s67
      %p69 = scmp.eq.s32.totalorder %s68, 0
      %s71 = sadd.s32 %s70, 1
      %s72 = scalar_select %p69, %s70, %s71
      %p75 = pneg %p69
      %p76 = scmp.eq.s32.totalorder %s18, 1
      %p77 = por %p75, %p76
      %p78 = scmp.ne.s32.totalorder %s70, %s73
      %p79 = scmp.eq.s32.totalorder %s18, 0
      %p80 = por %p78, %p79
      %p81 = scmp.ne.s32.totalorder %s70, %s73
      %p82 = scmp.eq.s32.totalorder %s23, 1
      %p83 = por %p81, %p82
      %p84 = scmp.ne.s32.totalorder %s73, %s74
      %p85 = scmp.eq.s32.totalorder %s23, 0
      %p86 = por %p84, %p85
      %p87 = scmp.ne.s32.totalorder %s73, %s74
      %p88 = scmp.eq.s32.totalorder %s24, 1
      %p89 = por %p87, %p88
      %p91 = scmp.ne.s32.totalorder %s74, %s90
      %p92 = scmp.eq.s32.totalorder %s24, 0
      %p93 = por %p91, %p92
      %s94 = ssub.s32 %s26, %s33
      %s95 = ssub.s32 %s25, %s37
      %s96 = sor.u32 %s94, %s95
      %p97 = scmp.eq.s32.totalorder %s96, 0
      %s99 = sadd.s32 %s98, 1
      %s100 = scalar_select %p97, %s98, %s99
      %p103 = pneg %p97
      %p104 = scmp.eq.s32.totalorder %s18, 1
      %p105 = por %p103, %p104
      %p106 = scmp.ne.s32.totalorder %s98, %s101
      %p107 = scmp.eq.s32.totalorder %s18, 0
      %p108 = por %p106, %p107
      %p109 = scmp.ne.s32.totalorder %s98, %s101
      %p110 = scmp.eq.s32.totalorder %s23, 1
      %p111 = por %p109, %p110
      %p112 = scmp.ne.s32.totalorder %s101, %s102
      %p113 = scmp.eq.s32.totalorder %s23, 0
      %p114 = por %p112, %p113
      %p115 = scmp.ne.s32.totalorder %s101, %s102
      %p116 = scmp.eq.s32.totalorder %s24, 1
      %p117 = por %p115, %p116
      %p119 = scmp.ne.s32.totalorder %s102, %s118
      %p120 = scmp.eq.s32.totalorder %s24, 0
      %p121 = por %p119, %p120
      %s122 = ssub.s32 %s25, %s37
      %p123 = scmp.eq.s32.totalorder %s122, 0
      %s125 = sadd.s32 %s124, 1
      %s126 = scalar_select %p123, %s124, %s125
      %p129 = pneg %p123
      %p130 = scmp.eq.s32.totalorder %s18, 1
      %p131 = por %p129, %p130
      %p132 = scmp.ne.s32.totalorder %s124, %s127
      %p133 = scmp.eq.s32.totalorder %s18, 0
      %p134 = por %p132, %p133
      %p135 = scmp.ne.s32.totalorder %s124, %s127
      %p136 = scmp.eq.s32.totalorder %s23, 1
      %p137 = por %p135, %p136
      %p138 = scmp.ne.s32.totalorder %s127, %s128
      %p139 = scmp.eq.s32.totalorder %s23, 0
      %p140 = por %p138, %p139
      %p141 = scmp.ne.s32.totalorder %s127, %s128
      %p142 = scmp.eq.s32.totalorder %s24, 1
      %p143 = por %p141, %p142
      %p145 = scmp.ne.s32.totalorder %s128, %s144
      %p146 = scmp.eq.s32.totalorder %s24, 0
      %p147 = por %p145, %p146
      %s149 = sadd.s32 %s148, 1
      %p152 = scmp.eq.s32.totalorder %s18, 1
      %p153 = scmp.ne.s32.totalorder %s148, %s150
      %p154 = scmp.eq.s32.totalorder %s18, 0
      %p155 = por %p153, %p154
      %p156 = scmp.ne.s32.totalorder %s148, %s150
      %p157 = scmp.eq.s32.totalorder %s23, 1
      %p158 = por %p156, %p157
      %p159 = scmp.ne.s32.totalorder %s150, %s151
      %p160 = scmp.eq.s32.totalorder %s23, 0
      %p161 = por %p159, %p160
      %p162 = scmp.ne.s32.totalorder %s150, %s151
      %p163 = scmp.eq.s32.totalorder %s24, 1
      %p164 = por %p162, %p163
      %p166 = scmp.ne.s32.totalorder %s151, %s165
      %p167 = scmp.eq.s32.totalorder %s24, 0
      %p168 = por %p166, %p167
      %s170 = sadd.s32 %s169, 1
      %p173 = scmp.eq.s32.totalorder %s18, 1
      %p174 = scmp.ne.s32.totalorder %s169, %s171
      %p175 = scmp.eq.s32.totalorder %s18, 0
      %p176 = por %p174, %p175
      %p177 = scmp.ne.s32.totalorder %s169, %s171
      %p178 = scmp.eq.s32.totalorder %s23, 1
      %p179 = por %p177, %p178
      %p180 = scmp.ne.s32.totalorder %s171, %s172
      %p181 = scmp.eq.s32.totalorder %s23, 0
      %p182 = por %p180, %p181
      %p183 = scmp.ne.s32.totalorder %s171, %s172
      %p184 = scmp.eq.s32.totalorder %s24, 1
      %p185 = por %p183, %p184
      %p187 = scmp.ne.s32.totalorder %s172, %s186
      %p188 = scmp.eq.s32.totalorder %s24, 0
      %p189 = por %p187, %p188
      %s191 = sadd.s32 %s190, 1
      %p194 = scmp.eq.s32.totalorder %s18, 1
      %p195 = scmp.ne.s32.totalorder %s190, %s192
      %p196 = scmp.eq.s32.totalorder %s18, 0
      %p197 = por %p195, %p196
      %p198 = scmp.ne.s32.totalorder %s190, %s192
      %p199 = scmp.eq.s32.totalorder %s23, 1
      %p200 = por %p198, %p199
      %p201 = scmp.ne.s32.totalorder %s192, %s193
      %p202 = scmp.eq.s32.totalorder %s23, 0
      %p203 = por %p201, %p202
      %p204 = scmp.ne.s32.totalorder %s192, %s193
      %p205 = scmp.eq.s32.totalorder %s24, 1
      %p206 = por %p204, %p205
      %p208 = scmp.ne.s32.totalorder %s193, %s207
      %p209 = scmp.eq.s32.totalorder %s24, 0
      %p210 = por %p208, %p209
      %s212 = sadd.s32 %s211, 1
      %p215 = scmp.eq.s32.totalorder %s18, 1
      %p216 = scmp.ne.s32.totalorder %s211, %s213
      %p217 = scmp.eq.s32.totalorder %s18, 0
      %p218 = por %p216, %p217
      %p219 = scmp.ne.s32.totalorder %s211, %s213
      %p220 = scmp.eq.s32.totalorder %s23, 1
      %p221 = por %p219, %p220
      %p222 = scmp.ne.s32.totalorder %s213, %s214
      %p223 = scmp.eq.s32.totalorder %s23, 0
      %p224 = por %p222, %p223
      %p225 = scmp.ne.s32.totalorder %s213, %s214
      %p226 = scmp.eq.s32.totalorder %s24, 1
      %p227 = por %p225, %p226
      %p229 = scmp.ne.s32.totalorder %s214, %s228
      %p230 = scmp.eq.s32.totalorder %s24, 0
      %p231 = por %p229, %p230
      %s233 = sadd.s32 %s232, 1
      %p236 = scmp.eq.s32.totalorder %s18, 1
      %p237 = scmp.ne.s32.totalorder %s232, %s234
      %p238 = scmp.eq.s32.totalorder %s18, 0
      %p239 = por %p237, %p238
      %p240 = scmp.ne.s32.totalorder %s232, %s234
      %p241 = scmp.eq.s32.totalorder %s23, 1
      %p242 = por %p240, %p241
      %p243 = scmp.ne.s32.totalorder %s234, %s235
      %p244 = scmp.eq.s32.totalorder %s23, 0
      %p245 = por %p243, %p244
      %p246 = scmp.ne.s32.totalorder %s234, %s235
      %p247 = scmp.eq.s32.totalorder %s24, 1
      %p248 = por %p246, %p247
      %p250 = scmp.ne.s32.totalorder %s235, %s249
      %p251 = scmp.eq.s32.totalorder %s24, 0
      %p252 = por %p250, %p251
      %s253 = ssub.s32 %s25, %s37
      %p254 = scmp.eq.s32.totalorder %s253, 0
      %s256 = sadd.s32 %s255, 1
      %s257 = scalar_select %p254, %s255, %s256
      %p260 = pneg %p254
      %p261 = scmp.eq.s32.totalorder %s18, 1
      %p262 = por %p260, %p261
      %p263 = scmp.ne.s32.totalorder %s255, %s258
      %p264 = scmp.eq.s32.totalorder %s18, 0
      %p265 = por %p263, %p264
      %p266 = scmp.ne.s32.totalorder %s255, %s258
      %p267 = scmp.eq.s32.totalorder %s23, 1
      %p268 = por %p266, %p267
      %p269 = scmp.ne.s32.totalorder %s258, %s259
      %p270 = scmp.eq.s32.totalorder %s23, 0
      %p271 = por %p269, %p270
      %p272 = scmp.ne.s32.totalorder %s258, %s259
      %p273 = scmp.eq.s32.totalorder %s24, 1
      %p274 = por %p272, %p273
      %p276 = scmp.ne.s32.totalorder %s259, %s275
      %p277 = scmp.eq.s32.totalorder %s24, 0
      %p278 = por %p276, %p277
      %s279 = ssub.s32 %s25, %s37
      %p280 = scmp.eq.s32.totalorder %s279, 0
      %s282 = sadd.s32 %s281, 1
      %s283 = scalar_select %p280, %s281, %s282
      %p286 = pneg %p280
      %p287 = scmp.eq.s32.totalorder %s18, 1
      %p288 = por %p286, %p287
      %p289 = scmp.ne.s32.totalorder %s281, %s284
      %p290 = scmp.eq.s32.totalorder %s18, 0
      %p291 = por %p289, %p290
      %p292 = scmp.ne.s32.totalorder %s281, %s284
      %p293 = scmp.eq.s32.totalorder %s23, 1
      %p294 = por %p292, %p293
      %p295 = scmp.ne.s32.totalorder %s284, %s285
      %p296 = scmp.eq.s32.totalorder %s23, 0
      %p297 = por %p295, %p296
      %p298 = scmp.ne.s32.totalorder %s284, %s285
      %p299 = scmp.eq.s32.totalorder %s24, 1
      %p300 = por %p298, %p299
      %p302 = scmp.ne.s32.totalorder %s285, %s301
      %p303 = scmp.eq.s32.totalorder %s24, 0
      %p304 = por %p302, %p303
      %p305 = scmp.le.s32.totalorder 1, %s18
      %p306 = scmp.lt.s32.totalorder %s18, 3
      %p307 = pnand %p305, %p306
      %p308 = pneg %p307
      // Predicated region
      $region9: #{tpu_custom_call.1} parent=5 // pred_check
        _
      $region10: #{tpu_custom_call.1} parent=5 // pred_check_branch
        %310 = sbr.rel (%p307) target = $region12
      $region11: #{tpu_custom_call.1} parent=5 // pred_region
        %s311 = ssub.s32 %s18, 1
        // Predicated region
        $region13: #{tpu_custom_call.1} parent=11 // pred_check
          %p312 = pneg %p140
        $region14: #{tpu_custom_call.1} parent=11 // pred_check_branch
          %314 = sbr.rel (%p312) target = $region16
        $region15: #{tpu_custom_call.1} parent=11 // pred_region
          %s315 = smul.u32 2, %s27
          %p316 = scmp.lt.s32.totalorder %s315, 1
          %s317 = scalar_select %p316, %s315, 1
          %s318 = smul.addr %s317, 8
          %s319 = scalar_lea.vmem %s3, %s318
          %s320 = smul.u32 2, %s27
        $region16: #{tpu_custom_call.1} parent=11 // pred_fallthru
          _
        // Predicated region
        $region17: #{tpu_custom_call.1} parent=11 // pred_check
          %p321 = pneg %p161
        $region18: #{tpu_custom_call.1} parent=11 // pred_check_branch
          %323 = sbr.rel (%p321) target = $region20
        $region19: #{tpu_custom_call.1} parent=11 // pred_region
          _
        $region20: #{tpu_custom_call.1} parent=11 // pred_fallthru
          _
        // Predicated region
        $region21: #{tpu_custom_call.1} parent=11 // pred_check
          %p324 = pneg %p182
        $region22: #{tpu_custom_call.1} parent=11 // pred_check_branch
          %326 = sbr.rel (%p324) target = $region24
        $region23: #{tpu_custom_call.1} parent=11 // pred_region
          _
        $region24: #{tpu_custom_call.1} parent=11 // pred_fallthru
          _
        // Predicated region
        $region25: #{tpu_custom_call.1} parent=11 // pred_check
          %p327 = pneg %p203
        $region26: #{tpu_custom_call.1} parent=11 // pred_check_branch
          %329 = sbr.rel (%p327) target = $region28
        $region27: #{tpu_custom_call.1} parent=11 // pred_region
          _
        $region28: #{tpu_custom_call.1} parent=11 // pred_fallthru
          _
        // Predicated region
        $region29: #{tpu_custom_call.1} parent=11 // pred_check
          %p330 = pneg %p224
        $region30: #{tpu_custom_call.1} parent=11 // pred_check_branch
          %332 = sbr.rel (%p330) target = $region32
        $region31: #{tpu_custom_call.1} parent=11 // pred_region
          _
        $region32: #{tpu_custom_call.1} parent=11 // pred_fallthru
          _
        // Predicated region
        $region33: #{tpu_custom_call.1} parent=11 // pred_check
          %p333 = pneg %p245
        $region34: #{tpu_custom_call.1} parent=11 // pred_check_branch
          %335 = sbr.rel (%p333) target = $region36
        $region35: #{tpu_custom_call.1} parent=11 // pred_region
          _
        $region36: #{tpu_custom_call.1} parent=11 // pred_fallthru
          _
      $region12: #{tpu_custom_call.1} parent=5 // pred_fallthru
        _
      %p336 = scmp.lt.s32.totalorder %s18, 2
      // Predicated region
      $region37: #{tpu_custom_call.1} parent=5 // pred_check
        %p337 = pneg %p336
      $region38: #{tpu_custom_call.1} parent=5 // pred_check_branch
        %339 = sbr.rel (%p337) target = $region40
      $region39: #{tpu_custom_call.1} parent=5 // pred_region
        // Predicated region
        $region41: #{tpu_custom_call.1} parent=39 // pred_check
          %p340 = pneg %p52
        $region42: #{tpu_custom_call.1} parent=39 // pred_check_branch
          %342 = sbr.rel (%p340) target = $region44
        $region43: #{tpu_custom_call.1} parent=39 // pred_region
          %s343 = smul.u32 4, %s26
          %s344 = smul.u32 2, %s25
          %p345 = scmp.lt.s32.totalorder %s343, 7
          %s346 = scalar_select %p345, %s343, 7
          %p347 = scmp.lt.s32.totalorder %s344, 1
          %s348 = scalar_select %p347, %s344, 1
          %s349 = smul.addr %s346, 2
          %s350 = sadd.s32 %s348, %s349
          %s351 = smul.addr %s350, 4
          %s352 = scalar_lea.vmem %s0, %s351
          %s353 = smul.u32 4, %s26
          %s354 = smul.u32 2, %s25
        $region44: #{tpu_custom_call.1} parent=39 // pred_fallthru
          _
        // Predicated region
        $region45: #{tpu_custom_call.1} parent=39 // pred_check
          %p355 = pneg %p80
        $region46: #{tpu_custom_call.1} parent=39 // pred_check_branch
          %357 = sbr.rel (%p355) target = $region48
        $region47: #{tpu_custom_call.1} parent=39 // pred_region
          %s358 = smul.u32 4, %s26
          %s359 = smul.u32 2, %s25
          %p360 = scmp.lt.s32.totalorder %s358, 7
          %s361 = scalar_select %p360, %s358, 7
          %p362 = scmp.lt.s32.totalorder %s359, 1
          %s363 = scalar_select %p362, %s359, 1
          %s364 = smul.addr %s361, 2
          %s365 = sadd.s32 %s363, %s364
          %s366 = smul.addr %s365, 8
          %s367 = scalar_lea.vmem %s1, %s366
          %s368 = smul.u32 4, %s26
          %s369 = smul.u32 2, %s25
        $region48: #{tpu_custom_call.1} parent=39 // pred_fallthru
          _
        // Predicated region
        $region49: #{tpu_custom_call.1} parent=39 // pred_check
          %p370 = pneg %p108
        $region50: #{tpu_custom_call.1} parent=39 // pred_check_branch
          %372 = sbr.rel (%p370) target = $region52
        $region51: #{tpu_custom_call.1} parent=39 // pred_region
          %s373 = smul.u32 4, %s26
          %s374 = smul.u32 2, %s25
          %p375 = scmp.lt.s32.totalorder %s373, 7
          %s376 = scalar_select %p375, %s373, 7
          %p377 = scmp.lt.s32.totalorder %s374, 1
          %s378 = scalar_select %p377, %s374, 1
          %s379 = smul.addr %s376, 2
          %s380 = sadd.s32 %s378, %s379
          %s381 = smul.addr %s380, 8
          %s382 = scalar_lea.vmem %s2, %s381
          %s383 = smul.u32 4, %s26
          %s384 = smul.u32 2, %s25
        $region52: #{tpu_custom_call.1} parent=39 // pred_fallthru
          _
      $region40: #{tpu_custom_call.1} parent=5 // pred_fallthru
        _
      %p385 = scmp.le.s32.totalorder 1, %s18
      %p386 = scmp.lt.s32.totalorder %s18, 3
      %p387 = pnand %p385, %p386
      %p388 = pneg %p387
      // Predicated region
      $region53: #{tpu_custom_call.1} parent=5 // pred_check
        _
      $region54: #{tpu_custom_call.1} parent=5 // pred_check_branch
        %390 = sbr.rel (%p387) target = $region56
      $region55: #{tpu_custom_call.1} parent=5 // pred_region
        %s391 = ssub.s32 %s18, 1
        %s392 = smul.u32 4, %s28
        %s393 = smul.u32 2, %s27
        %p394 = scmp.lt.s32.totalorder %s392, 7
        %s395 = scalar_select %p394, %s392, 7
        %p396 = scmp.lt.s32.totalorder %s393, 1
        %s397 = scalar_select %p396, %s393, 1
        %s398 = smul.addr %s395, 2
        %s399 = sadd.s32 %s397, %s398
        %s400 = smul.addr %s399, 4
        %s401 = scalar_lea.vmem %s0, %s400
        %p402 = pneg %p58
        %p403 = pneg %p55
        %s404 = smul.u32 4, %s28
        %s405 = smul.u32 2, %s27
        %p406 = scmp.lt.s32.totalorder %s404, 7
        %s407 = scalar_select %p406, %s404, 7
        %p408 = scmp.lt.s32.totalorder %s405, 1
        %s409 = scalar_select %p408, %s405, 1
        %s410 = smul.addr %s407, 2
        %s411 = sadd.s32 %s409, %s410
        %s412 = smul.addr %s411, 8
        %s413 = scalar_lea.vmem %s1, %s412
        %p414 = pneg %p86
        %p415 = pneg %p83
        %s416 = smul.u32 4, %s28
        %s417 = smul.u32 2, %s27
        %p418 = scmp.lt.s32.totalorder %s416, 7
        %s419 = scalar_select %p418, %s416, 7
        %p420 = scmp.lt.s32.totalorder %s417, 1
        %s421 = scalar_select %p420, %s417, 1
        %s422 = smul.addr %s419, 2
        %s423 = sadd.s32 %s421, %s422
        %s424 = smul.addr %s423, 8
        %s425 = scalar_lea.vmem %s2, %s424
        %p426 = pneg %p114
        %p427 = pneg %p111
        %s428 = smul.u32 2, %s27
        %p429 = scmp.lt.s32.totalorder %s428, 1
        %s430 = scalar_select %p429, %s428, 1
        %s431 = smul.addr %s430, 8
        %s432 = scalar_lea.vmem %s3, %s431
        %p433 = pneg %p140
        %p434 = pneg %p137
        %p435 = pneg %p161
        %p436 = pneg %p158
        %p437 = pneg %p182
        %p438 = pneg %p179
        %p439 = pneg %p203
        %p440 = pneg %p200
        %p441 = pneg %p224
        %p442 = pneg %p221
        %p443 = pneg %p245
        %p444 = pneg %p242
        %p445 = pneg %p271
        %p446 = pneg %p268
        %s447 = smul.u32 2, %s27
        %p448 = scmp.lt.s32.totalorder %s447, 1
        %s449 = scalar_select %p448, %s447, 1
        %s450 = smul.addr %s449, 8
        %s451 = scalar_lea.vmem %s9, %s450
        %p452 = pneg %p297
        %p453 = pneg %p294
        %s454 = smul.u32 4, %s28
        %s455 = smul.u32 2, %s27
        %p456 = scmp.lt.s32.totalorder %s454, 7
        %s457 = scalar_select %p456, %s454, 7
        %p458 = scmp.lt.s32.totalorder %s455, 1
        %s459 = scalar_select %p458, %s455, 1
        %s460 = smul.addr %s457, 2
        %s461 = sadd.s32 %s459, %s460
        %s462 = smul.addr %s461, 4
        %s463 = scalar_lea.vmem %s0, %s462
        %s464 = smul.u32 4, %s28
        %s465 = smul.u32 2, %s27
        %s466 = smul.u32 4, %s28
        %s467 = smul.u32 2, %s27
        %p468 = scmp.lt.s32.totalorder %s466, 7
        %s469 = scalar_select %p468, %s466, 7
        %p470 = scmp.lt.s32.totalorder %s467, 1
        %s471 = scalar_select %p470, %s467, 1
        %s472 = smul.addr %s469, 2
        %s473 = sadd.s32 %s471, %s472
        %s474 = smul.addr %s473, 8
        %s475 = scalar_lea.vmem %s1, %s474
        %s476 = smul.u32 4, %s28
        %s477 = smul.u32 2, %s27
        %s478 = smul.u32 4, %s28
        %s479 = smul.u32 2, %s27
        %p480 = scmp.lt.s32.totalorder %s478, 7
        %s481 = scalar_select %p480, %s478, 7
        %p482 = scmp.lt.s32.totalorder %s479, 1
        %s483 = scalar_select %p482, %s479, 1
        %s484 = smul.addr %s481, 2
        %s485 = sadd.s32 %s483, %s484
        %s486 = smul.addr %s485, 8
        %s487 = scalar_lea.vmem %s2, %s486
        %s488 = smul.u32 4, %s28
        %s489 = smul.u32 2, %s27
        %s490 = smul.u32 2, %s27
        %p491 = scmp.lt.s32.totalorder %s490, 1
        %s492 = scalar_select %p491, %s490, 1
        %s493 = smul.addr %s492, 8
        %s494 = scalar_lea.vmem %s3, %s493
        %s495 = smul.u32 2, %s27
        %s496 = smul.u32 2, %s27
        %p497 = scmp.lt.s32.totalorder %s496, 1
        %s498 = scalar_select %p497, %s496, 1
        %s499 = smul.addr %s498, 8
        %s500 = scalar_lea.vmem %s9, %s499
        %s501 = smul.u32 2, %s27
        %s502 = smul.u32 2, %s27
        %p504 = scmp.eq.s32.totalorder %s28, 0
        // Predicated region
        $region57: #{tpu_custom_call.1} parent=55 // pred_check
          %p505 = pneg %p504
        $region58: #{tpu_custom_call.1} parent=55 // pred_check_branch
          %507 = sbr.rel (%p505) target = $region60
        $region59: #{tpu_custom_call.1} parent=55 // pred_region
          %v508 = vld [vmem:[%s494] sm:$0xff]
          %v509 = vld [vmem:[%s494 + $0x8] sm:$0xff]
          %vm510 = vcmask 261120
          %511 = vst.msk [vmem:[#allocation2] sm:$0xff] %vm510, %v508
          %512 = vst.msk [vmem:[#allocation2 + $0x8] sm:$0xff] %vm510, %v509
          %vm513 = vcmask 7168
          %514 = vst.msk [vmem:[#allocation3] sm:$0xff] %vm513, 0.0
          %515 = vst.msk [vmem:[#allocation3 + $0x8] sm:$0xff] %vm513, 0.0
          %516 = vst.msk [vmem:[#allocation4] sm:$0xff] %vm513, 0.0
          %517 = vst.msk [vmem:[#allocation4 + $0x8] sm:$0xff] %vm513, 0.0
        $region60: #{tpu_custom_call.1} parent=55 // pred_fallthru
          _
        %v518 = vld [vmem:[%s4] sm:$0xf]
        %v519 = vld [vmem:[%s4 + $0x4] sm:$0xf]
        %v520 = vld [vmem:[%s4 + $0x8] sm:$0xf]
        %v521 = vld [vmem:[%s4 + $0xc] sm:$0xf]
        %v522 = vld [vmem:[%s5] sm:$0xf]
        %v523 = vld [vmem:[%s5 + $0x4] sm:$0xf]
        %v524 = vld [vmem:[%s5 + $0x8] sm:$0xf]
        %v525 = vld [vmem:[%s5 + $0xc] sm:$0xf]
        %v526 = vld [vmem:[%s6] sm:$0x1]
        %v527 = vld [vmem:[%s7] sm:$0xf]
        %v528 = vld [vmem:[%s7 + $0x4] sm:$0xf]
        %v529 = vld [vmem:[%s7 + $0x8] sm:$0xf]
        %v530 = vld [vmem:[%s7 + $0xc] sm:$0xf]
        %v531 = vld [vmem:[%s8] sm:$0x1]
        %v532 = vld [vmem:[%s463] sm:$0xf]
        %v533 = vld [vmem:[%s463 + $0x4] sm:$0xf]
        %v534 = vld [vmem:[%s463 + $0x8] sm:$0xf]
        %v535 = vld [vmem:[%s463 + $0xc] sm:$0xf]
        %v536 = vld [vmem:[%s463 + $0x10] sm:$0xf]
        %v537 = vld [vmem:[%s463 + $0x14] sm:$0xf]
        %v538 = vld [vmem:[%s463 + $0x18] sm:$0xf]
        %v539 = vld [vmem:[%s463 + $0x1c] sm:$0xf]
        %v541 = vlaneseq
        %v542 = vshrl.u32 %v541, 7
        %v543 = vsub.s32 0, %v542
        %v544 = vrot.slane %v526, %v543
        %v554 = vunpack.c.l.b16 %v532
        %v555 = vunpack.c.l.b16 %v533
        %v556 = vunpack.c.l.b16 %v534
        %v557 = vunpack.c.l.b16 %v535
        %v558 = vunpack.c.l.b16 %v536
        %v559 = vunpack.c.l.b16 %v537
        %v560 = vunpack.c.l.b16 %v538
        %v561 = vunpack.c.l.b16 %v539
        %v562 = vpack.c.b16 %v555, %v554
        %v563 = vpack.c.b16 %v557, %v556
        %v564 = vpack.c.b16 %v559, %v558
        %v565 = vpack.c.b16 %v561, %v560
        %v570 = vunpack.c.l.b16 %v518
        %v571 = vunpack.c.l.b16 %v519
        %v572 = vunpack.c.l.b16 %v520
        %v573 = vunpack.c.l.b16 %v521
        %v574 = vpack.c.b16 %v571, %v570
        %v575 = vpack.c.b16 %v573, %v572
        %vm578 = vcmask 261120
        %v580 = vsel %vm578, %v562, 0
        %v583 = vsel %vm578, %v563, 0
        %v586 = vsel %vm578, %v564, 0
        %v589 = vsel %vm578, %v565, 0
        %591 = vmatprep.subr.bf16.mxu0 0
        %592 = vmatpush1.bf16.msra.mxu0 0
        %593 = vmatprep.subr.bf16.mxu0 0
        %594 = vmatpush1.bf16.msra.mxu0 0
        %595 = vmatprep.subr.bf16.mxu0 0
        %596 = vmatpush1.bf16.msra.mxu0 0
        %597 = vmatprep.subr.bf16.mxu0 0
        %598 = vmatpush1.bf16.msra.mxu0 0
        %599 = vmatprep.subr.bf16.mxu0 0
        %600 = vmatpush1.bf16.msra.mxu0 0
        %601 = vmatprep.subr.bf16.mxu0 0
        %602 = vmatpush1.bf16.msra.mxu0 0
        %603 = vmatprep.subr.bf16.mxu0 0
        %604 = vmatpush1.bf16.msra.mxu0 %v575
        %605 = vmatprep.subr.bf16.mxu0 0
        %606 = vmatpush1.bf16.msra.mxu0 %v574
        %607 = vmatprep.subr.bf16.mxu0 0
        %608 = vmatpush2.bf16.msra.mxu0 0
        %609 = vmatprep.subr.bf16.mxu0 0
        %610 = vmatpush2.bf16.msra.mxu0 0
        %611 = vmatprep.subr.bf16.mxu0 0
        %612 = vmatpush2.bf16.msra.mxu0 0
        %613 = vmatprep.subr.bf16.mxu0 0
        %614 = vmatpush2.bf16.msra.mxu0 0
        %615 = vmatprep.subr.bf16.mxu0 0
        %616 = vmatpush2.bf16.msra.mxu0 0
        %617 = vmatprep.subr.bf16.mxu0 0
        %618 = vmatpush2.bf16.msra.mxu0 0
        %619 = vmatprep.subr.bf16.mxu0 0
        %620 = vmatpush2.bf16.msra.mxu0 0
        %621 = vmatprep.subr.bf16.mxu0 0
        %622 = vmatpush2.bf16.msra.mxu0 0
        %623 = vmatprep.mubr.bf16.mxu0 0
        %624 = vmatmul.mubr.bf16.gmra.mxu0 %v580
        %v625 = vpop.f32.mrf.mxu0
        %v626 = vadd.f32 %v544, %v625
        %v627 = vpop.f32.mrf.mxu0
        %v628 = vpop.f32.mrf.mxu0
        %v629 = vadd.f32 %v544, %v628
        %v630 = vpop.f32.mrf.mxu0
        %631 = vmatprep.mubr.bf16.mxu0 0
        %632 = vmatmul.mubr.bf16.gmra.mxu0 %v583
        %v633 = vpop.f32.mrf.mxu0
        %v634 = vadd.f32 %v544, %v633
        %v635 = vpop.f32.mrf.mxu0
        %v636 = vpop.f32.mrf.mxu0
        %v637 = vadd.f32 %v544, %v636
        %v638 = vpop.f32.mrf.mxu0
        %639 = vmatprep.mubr.bf16.mxu0 0
        %640 = vmatmul.mubr.bf16.gmra.mxu0 %v586
        %v641 = vpop.f32.mrf.mxu0
        %v642 = vadd.f32 %v544, %v641
        %v643 = vpop.f32.mrf.mxu0
        %v644 = vpop.f32.mrf.mxu0
        %v645 = vadd.f32 %v544, %v644
        %v646 = vpop.f32.mrf.mxu0
        %647 = vmatprep.mubr.bf16.mxu0 0
        %648 = vmatmul.mubr.bf16.gmra.mxu0 %v589
        %v649 = vpop.f32.mrf.mxu0
        %v650 = vadd.f32 %v544, %v649
        %v651 = vpop.f32.mrf.mxu0
        %v652 = vpop.f32.mrf.mxu0
        %v653 = vadd.f32 %v544, %v652
        %v654 = vpop.f32.mrf.mxu0
        %655 = vdwg.mxu0
        %v656 = vpack.c.bf16 %v629, %v626
        %v657 = vpack.c.bf16 %v637, %v634
        %v658 = vpack.c.bf16 %v645, %v642
        %v659 = vpack.c.bf16 %v653, %v650
        %v664 = vunpack.c.l.b16 %v656
        %v665 = vunpack.c.h.b16 %v656
        %v666 = vunpack.c.l.b16 %v657
        %v667 = vunpack.c.h.b16 %v657
        %v668 = vunpack.c.l.b16 %v658
        %v669 = vunpack.c.h.b16 %v658
        %v670 = vunpack.c.l.b16 %v659
        %v671 = vunpack.c.h.b16 %v659
        %v672 = vpack.c.b16 %v664, %v664
        %v673 = vpack.c.b16 %v665, %v665
        %v674 = vpack.c.b16 %v666, %v666
        %v675 = vpack.c.b16 %v667, %v667
        %v676 = vpack.c.b16 %v668, %v668
        %v677 = vpack.c.b16 %v669, %v669
        %v678 = vpack.c.b16 %v670, %v670
        %v679 = vpack.c.b16 %v671, %v671
        %vm688 = vcmask 257024
        %689 = vst.msk [vmem:[#allocation5] sm:$0xf] %vm688, %v672
        %690 = vst.msk [vmem:[#allocation5 + $0x4] sm:$0xf] %vm688, %v673
        %691 = vst.msk [vmem:[#allocation5 + $0x8] sm:$0xf] %vm688, %v674
        %692 = vst.msk [vmem:[#allocation5 + $0xc] sm:$0xf] %vm688, %v675
        %693 = vst.msk [vmem:[#allocation5 + $0x10] sm:$0xf] %vm688, %v676
        %694 = vst.msk [vmem:[#allocation5 + $0x14] sm:$0xf] %vm688, %v677
        %695 = vst.msk [vmem:[#allocation5 + $0x18] sm:$0xf] %vm688, %v678
        %696 = vst.msk [vmem:[#allocation5 + $0x1c] sm:$0xf] %vm688, %v679
        %v697 = vld [vmem:[#allocation2] sm:$0xff]
        %v698 = vld [vmem:[#allocation2 + $0x8] sm:$0xff]
        %v699 = vld [vmem:[%s487] sm:$0xff]
        %v700 = vld [vmem:[%s487 + $0x8] sm:$0xff]
        %702 = vset.pattern.permute.xlu0 0
        %703 = vperm.xlu0 %702, %v699
        %v704 = vpop.permute.xlu0 %703
        %707 = vset.pattern.permute.xlu0 0
        %708 = vperm.xlu0 %707, %v700
        %v709 = vpop.permute.xlu0 %708
        %v711 = vmul.f32 %v697, %v704
        %v712 = vmul.f32 %v698, %v709
        %v713 = vpack.c.bf16 %v712, %v711
        %v714 = vld [vmem:[#allocation5] sm:$0xf]
        %v715 = vld [vmem:[#allocation5 + $0x4] sm:$0xf]
        %v716 = vunpack.c.l.bf16 %v714
        %v717 = vunpack.c.l.bf16 %v715
        %v722 = vunpack.c.l.b16 %v522
        %v723 = vunpack.c.l.b16 %v523
        %v724 = vunpack.c.l.b16 %v524
        %v725 = vunpack.c.l.b16 %v525
        %v726 = vpack.c.b16 %v723, %v722
        %v727 = vpack.c.b16 %v725, %v724
        %v731 = vsel %vm578, %v713, 0
        %733 = vmatprep.subr.bf16.mxu0 0
        %734 = vmatpush1.bf16.msra.mxu0 0
        %735 = vmatprep.subr.bf16.mxu0 0
        %736 = vmatpush1.bf16.msra.mxu0 0
        %737 = vmatprep.subr.bf16.mxu0 0
        %738 = vmatpush1.bf16.msra.mxu0 0
        %739 = vmatprep.subr.bf16.mxu0 0
        %740 = vmatpush1.bf16.msra.mxu0 0
        %741 = vmatprep.subr.bf16.mxu0 0
        %742 = vmatpush1.bf16.msra.mxu0 0
        %743 = vmatprep.subr.bf16.mxu0 0
        %744 = vmatpush1.bf16.msra.mxu0 0
        %745 = vmatprep.subr.bf16.mxu0 0
        %746 = vmatpush1.bf16.msra.mxu0 %v727
        %747 = vmatprep.subr.bf16.mxu0 0
        %748 = vmatpush1.bf16.msra.mxu0 %v726
        %749 = vmatprep.subr.bf16.mxu0 0
        %750 = vmatpush2.bf16.msra.mxu0 0
        %751 = vmatprep.subr.bf16.mxu0 0
        %752 = vmatpush2.bf16.msra.mxu0 0
        %753 = vmatprep.subr.bf16.mxu0 0
        %754 = vmatpush2.bf16.msra.mxu0 0
        %755 = vmatprep.subr.bf16.mxu0 0
        %756 = vmatpush2.bf16.msra.mxu0 0
        %757 = vmatprep.subr.bf16.mxu0 0
        %758 = vmatpush2.bf16.msra.mxu0 0
        %759 = vmatprep.subr.bf16.mxu0 0
        %760 = vmatpush2.bf16.msra.mxu0 0
        %761 = vmatprep.subr.bf16.mxu0 0
        %762 = vmatpush2.bf16.msra.mxu0 0
        %763 = vmatprep.subr.bf16.mxu0 0
        %764 = vmatpush2.bf16.msra.mxu0 0
        %765 = vmatprep.mubr.bf16.mxu0 0
        %766 = vmatmul.mubr.bf16.gmra.mxu0 %v731
        %v767 = vpop.f32.mrf.mxu0
        %v768 = vadd.f32 0.0, %v767
        %v769 = vpop.f32.mrf.mxu0
        %v770 = vpop.f32.mrf.mxu0
        %v771 = vadd.f32 0.0, %v770
        %v772 = vpop.f32.mrf.mxu0
        %773 = vdwg.mxu0
        %v774 = vadd.f32 %v716, %v768
        %v775 = vadd.f32 %v717, %v771
        %v776 = vtanh.pop %v774
        %v777 = vtanh.pop %v775
        %v778 = vpack.c.bf16 %v777, %v776
        %v780 = vunpack.c.l.b16 %v778
        %v781 = vunpack.c.h.b16 %v778
        %v782 = vpack.c.b16 %v780, %v780
        %v783 = vpack.c.b16 %v781, %v781
        %786 = vst.msk [vmem:[#allocation5] sm:$0xf] %vm688, %v782
        %787 = vst.msk [vmem:[#allocation5 + $0x4] sm:$0xf] %vm688, %v783
        %s788 = scalar_lea.vmem %s487, 16
        %v789 = vld [vmem:[%s788] sm:$0xff]
        %v790 = vld [vmem:[%s788 + $0x8] sm:$0xff]
        %792 = vset.pattern.permute.xlu0 0
        %793 = vperm.xlu0 %792, %v789
        %v794 = vpop.permute.xlu0 %793
        %797 = vset.pattern.permute.xlu0 0
        %798 = vperm.xlu0 %797, %v790
        %v799 = vpop.permute.xlu0 %798
        %v801 = vmul.f32 %v776, %v794
        %v802 = vmul.f32 %v777, %v799
        %v803 = vpack.c.bf16 %v802, %v801
        %s804 = scalar_lea.vmem [#allocation5], 8
        %v805 = vld [vmem:[%s804] sm:$0xf]
        %v806 = vld [vmem:[%s804 + $0x4] sm:$0xf]
        %v807 = vunpack.c.l.bf16 %v805
        %v808 = vunpack.c.l.bf16 %v806
        %v810 = vsel %vm578, %v803, 0
        %812 = vmatprep.subr.bf16.mxu0 0
        %813 = vmatpush1.bf16.msra.mxu0 0
        %814 = vmatprep.subr.bf16.mxu0 0
        %815 = vmatpush1.bf16.msra.mxu0 0
        %816 = vmatprep.subr.bf16.mxu0 0
        %817 = vmatpush1.bf16.msra.mxu0 0
        %818 = vmatprep.subr.bf16.mxu0 0
        %819 = vmatpush1.bf16.msra.mxu0 0
        %820 = vmatprep.subr.bf16.mxu0 0
        %821 = vmatpush1.bf16.msra.mxu0 0
        %822 = vmatprep.subr.bf16.mxu0 0
        %823 = vmatpush1.bf16.msra.mxu0 0
        %824 = vmatprep.subr.bf16.mxu0 0
        %825 = vmatpush1.bf16.msra.mxu0 %v727
        %826 = vmatprep.subr.bf16.mxu0 0
        %827 = vmatpush1.bf16.msra.mxu0 %v726
        %828 = vmatprep.subr.bf16.mxu0 0
        %829 = vmatpush2.bf16.msra.mxu0 0
        %830 = vmatprep.subr.bf16.mxu0 0
        %831 = vmatpush2.bf16.msra.mxu0 0
        %832 = vmatprep.subr.bf16.mxu0 0
        %833 = vmatpush2.bf16.msra.mxu0 0
        %834 = vmatprep.subr.bf16.mxu0 0
        %835 = vmatpush2.bf16.msra.mxu0 0
        %836 = vmatprep.subr.bf16.mxu0 0
        %837 = vmatpush2.bf16.msra.mxu0 0
        %838 = vmatprep.subr.bf16.mxu0 0
        %839 = vmatpush2.bf16.msra.mxu0 0
        %840 = vmatprep.subr.bf16.mxu0 0
        %841 = vmatpush2.bf16.msra.mxu0 0
        %842 = vmatprep.subr.bf16.mxu0 0
        %843 = vmatpush2.bf16.msra.mxu0 0
        %844 = vmatprep.mubr.bf16.mxu0 0
        %845 = vmatmul.mubr.bf16.gmra.mxu0 %v810
        %v846 = vpop.f32.mrf.mxu0
        %v847 = vadd.f32 0.0, %v846
        %v848 = vpop.f32.mrf.mxu0
        %v849 = vpop.f32.mrf.mxu0
        %v850 = vadd.f32 0.0, %v849
        %v851 = vpop.f32.mrf.mxu0
        %852 = vdwg.mxu0
        %v853 = vadd.f32 %v807, %v847
        %v854 = vadd.f32 %v808, %v850
        %v855 = vtanh.pop %v853
        %v856 = vtanh.pop %v854
        %v857 = vpack.c.bf16 %v856, %v855
        %v859 = vunpack.c.l.b16 %v857
        %v860 = vunpack.c.h.b16 %v857
        %v861 = vpack.c.b16 %v859, %v859
        %v862 = vpack.c.b16 %v860, %v860
        %865 = vst.msk [vmem:[%s804] sm:$0xf] %vm688, %v861
        %866 = vst.msk [vmem:[%s804 + $0x4] sm:$0xf] %vm688, %v862
        %s867 = scalar_lea.vmem %s487, 32
        %v868 = vld [vmem:[%s867] sm:$0xff]
        %v869 = vld [vmem:[%s867 + $0x8] sm:$0xff]
        %871 = vset.pattern.permute.xlu0 0
        %872 = vperm.xlu0 %871, %v868
        %v873 = vpop.permute.xlu0 %872
        %876 = vset.pattern.permute.xlu0 0
        %877 = vperm.xlu0 %876, %v869
        %v878 = vpop.permute.xlu0 %877
        %v880 = vmul.f32 %v855, %v873
        %v881 = vmul.f32 %v856, %v878
        %v882 = vpack.c.bf16 %v881, %v880
        %s883 = scalar_lea.vmem [#allocation5], 16
        %v884 = vld [vmem:[%s883] sm:$0xf]
        %v885 = vld [vmem:[%s883 + $0x4] sm:$0xf]
        %v886 = vunpack.c.l.bf16 %v884
        %v887 = vunpack.c.l.bf16 %v885
        %v889 = vsel %vm578, %v882, 0
        %891 = vmatprep.subr.bf16.mxu0 0
        %892 = vmatpush1.bf16.msra.mxu0 0
        %893 = vmatprep.subr.bf16.mxu0 0
        %894 = vmatpush1.bf16.msra.mxu0 0
        %895 = vmatprep.subr.bf16.mxu0 0
        %896 = vmatpush1.bf16.msra.mxu0 0
        %897 = vmatprep.subr.bf16.mxu0 0
        %898 = vmatpush1.bf16.msra.mxu0 0
        %899 = vmatprep.subr.bf16.mxu0 0
        %900 = vmatpush1.bf16.msra.mxu0 0
        %901 = vmatprep.subr.bf16.mxu0 0
        %902 = vmatpush1.bf16.msra.mxu0 0
        %903 = vmatprep.subr.bf16.mxu0 0
        %904 = vmatpush1.bf16.msra.mxu0 %v727
        %905 = vmatprep.subr.bf16.mxu0 0
        %906 = vmatpush1.bf16.msra.mxu0 %v726
        %907 = vmatprep.subr.bf16.mxu0 0
        %908 = vmatpush2.bf16.msra.mxu0 0
        %909 = vmatprep.subr.bf16.mxu0 0
        %910 = vmatpush2.bf16.msra.mxu0 0
        %911 = vmatprep.subr.bf16.mxu0 0
        %912 = vmatpush2.bf16.msra.mxu0 0
        %913 = vmatprep.subr.bf16.mxu0 0
        %914 = vmatpush2.bf16.msra.mxu0 0
        %915 = vmatprep.subr.bf16.mxu0 0
        %916 = vmatpush2.bf16.msra.mxu0 0
        %917 = vmatprep.subr.bf16.mxu0 0
        %918 = vmatpush2.bf16.msra.mxu0 0
        %919 = vmatprep.subr.bf16.mxu0 0
        %920 = vmatpush2.bf16.msra.mxu0 0
        %921 = vmatprep.subr.bf16.mxu0 0
        %922 = vmatpush2.bf16.msra.mxu0 0
        %923 = vmatprep.mubr.bf16.mxu0 0
        %924 = vmatmul.mubr.bf16.gmra.mxu0 %v889
        %v925 = vpop.f32.mrf.mxu0
        %v926 = vadd.f32 0.0, %v925
        %v927 = vpop.f32.mrf.mxu0
        %v928 = vpop.f32.mrf.mxu0
        %v929 = vadd.f32 0.0, %v928
        %v930 = vpop.f32.mrf.mxu0
        %931 = vdwg.mxu0
        %v932 = vadd.f32 %v886, %v926
        %v933 = vadd.f32 %v887, %v929
        %v934 = vtanh.pop %v932
        %v935 = vtanh.pop %v933
        %v936 = vpack.c.bf16 %v935, %v934
        %v938 = vunpack.c.l.b16 %v936
        %v939 = vunpack.c.h.b16 %v936
        %v940 = vpack.c.b16 %v938, %v938
        %v941 = vpack.c.b16 %v939, %v939
        %944 = vst.msk [vmem:[%s883] sm:$0xf] %vm688, %v940
        %945 = vst.msk [vmem:[%s883 + $0x4] sm:$0xf] %vm688, %v941
        %s946 = scalar_lea.vmem %s487, 48
        %v947 = vld [vmem:[%s946] sm:$0xff]
        %v948 = vld [vmem:[%s946 + $0x8] sm:$0xff]
        %950 = vset.pattern.permute.xlu0 0
        %951 = vperm.xlu0 %950, %v947
        %v952 = vpop.permute.xlu0 %951
        %955 = vset.pattern.permute.xlu0 0
        %956 = vperm.xlu0 %955, %v948
        %v957 = vpop.permute.xlu0 %956
        %v959 = vmul.f32 %v934, %v952
        %v960 = vmul.f32 %v935, %v957
        %v961 = vpack.c.bf16 %v960, %v959
        %s962 = scalar_lea.vmem [#allocation5], 24
        %v963 = vld [vmem:[%s962] sm:$0xf]
        %v964 = vld [vmem:[%s962 + $0x4] sm:$0xf]
        %v965 = vunpack.c.l.bf16 %v963
        %v966 = vunpack.c.l.bf16 %v964
        %v968 = vsel %vm578, %v961, 0
        %970 = vmatprep.subr.bf16.mxu0 0
        %971 = vmatpush1.bf16.msra.mxu0 0
        %972 = vmatprep.subr.bf16.mxu0 0
        %973 = vmatpush1.bf16.msra.mxu0 0
        %974 = vmatprep.subr.bf16.mxu0 0
        %975 = vmatpush1.bf16.msra.mxu0 0
        %976 = vmatprep.subr.bf16.mxu0 0
        %977 = vmatpush1.bf16.msra.mxu0 0
        %978 = vmatprep.subr.bf16.mxu0 0
        %979 = vmatpush1.bf16.msra.mxu0 0
        %980 = vmatprep.subr.bf16.mxu0 0
        %981 = vmatpush1.bf16.msra.mxu0 0
        %982 = vmatprep.subr.bf16.mxu0 0
        %983 = vmatpush1.bf16.msra.mxu0 %v727
        %984 = vmatprep.subr.bf16.mxu0 0
        %985 = vmatpush1.bf16.msra.mxu0 %v726
        %986 = vmatprep.subr.bf16.mxu0 0
        %987 = vmatpush2.bf16.msra.mxu0 0
        %988 = vmatprep.subr.bf16.mxu0 0
        %989 = vmatpush2.bf16.msra.mxu0 0
        %990 = vmatprep.subr.bf16.mxu0 0
        %991 = vmatpush2.bf16.msra.mxu0 0
        %992 = vmatprep.subr.bf16.mxu0 0
        %993 = vmatpush2.bf16.msra.mxu0 0
        %994 = vmatprep.subr.bf16.mxu0 0
        %995 = vmatpush2.bf16.msra.mxu0 0
        %996 = vmatprep.subr.bf16.mxu0 0
        %997 = vmatpush2.bf16.msra.mxu0 0
        %998 = vmatprep.subr.bf16.mxu0 0
        %999 = vmatpush2.bf16.msra.mxu0 0
        %1000 = vmatprep.subr.bf16.mxu0 0
        %1001 = vmatpush2.bf16.msra.mxu0 0
        %1002 = vmatprep.mubr.bf16.mxu0 0
        %1003 = vmatmul.mubr.bf16.gmra.mxu0 %v968
        %v1004 = vpop.f32.mrf.mxu0
        %v1005 = vadd.f32 0.0, %v1004
        %v1006 = vpop.f32.mrf.mxu0
        %v1007 = vpop.f32.mrf.mxu0
        %v1008 = vadd.f32 0.0, %v1007
        %v1009 = vpop.f32.mrf.mxu0
        %1010 = vdwg.mxu0
        %v1011 = vadd.f32 %v965, %v1005
        %v1012 = vadd.f32 %v966, %v1008
        %v1013 = vtanh.pop %v1011
        %v1014 = vtanh.pop %v1012
        %v1015 = vpack.c.bf16 %v1014, %v1013
        %v1017 = vunpack.c.l.b16 %v1015
        %v1018 = vunpack.c.h.b16 %v1015
        %v1019 = vpack.c.b16 %v1017, %v1017
        %v1020 = vpack.c.b16 %v1018, %v1018
        %1023 = vst.msk [vmem:[%s962] sm:$0xf] %vm688, %v1019
        %1024 = vst.msk [vmem:[%s962 + $0x4] sm:$0xf] %vm688, %v1020
        %1025 = vst.msk [vmem:[#allocation2] sm:$0xff] %vm578, %v1013
        %1026 = vst.msk [vmem:[#allocation2 + $0x8] sm:$0xff] %vm578, %v1014
        %v1027 = vld [vmem:[#allocation5] sm:$0xf]
        %v1028 = vld [vmem:[#allocation5 + $0x4] sm:$0xf]
        %v1029 = vld [vmem:[#allocation5 + $0x8] sm:$0xf]
        %v1030 = vld [vmem:[#allocation5 + $0xc] sm:$0xf]
        %v1031 = vld [vmem:[#allocation5 + $0x10] sm:$0xf]
        %v1032 = vld [vmem:[#allocation5 + $0x14] sm:$0xf]
        %v1033 = vld [vmem:[#allocation5 + $0x18] sm:$0xf]
        %v1034 = vld [vmem:[#allocation5 + $0x1c] sm:$0xf]
        %v1036 = vlaneseq
        %v1037 = vshrl.u32 %v1036, 7
        %v1038 = vsub.s32 0, %v1037
        %v1039 = vrot.slane %v531, %v1038
        %v1049 = vunpack.c.l.b16 %v1027
        %v1050 = vunpack.c.l.b16 %v1028
        %v1051 = vunpack.c.l.b16 %v1029
        %v1052 = vunpack.c.l.b16 %v1030
        %v1053 = vunpack.c.l.b16 %v1031
        %v1054 = vunpack.c.l.b16 %v1032
        %v1055 = vunpack.c.l.b16 %v1033
        %v1056 = vunpack.c.l.b16 %v1034
        %v1057 = vpack.c.b16 %v1050, %v1049
        %v1058 = vpack.c.b16 %v1052, %v1051
        %v1059 = vpack.c.b16 %v1054, %v1053
        %v1060 = vpack.c.b16 %v1056, %v1055
        %v1065 = vunpack.c.l.b16 %v527
        %v1066 = vunpack.c.l.b16 %v528
        %v1067 = vunpack.c.l.b16 %v529
        %v1068 = vunpack.c.l.b16 %v530
        %v1069 = vpack.c.b16 %v1066, %v1065
        %v1070 = vpack.c.b16 %v1068, %v1067
        %v1074 = vsel %vm578, %v1057, 0
        %v1077 = vsel %vm578, %v1058, 0
        %v1080 = vsel %vm578, %v1059, 0
        %v1083 = vsel %vm578, %v1060, 0
        %1085 = vmatprep.subr.bf16.mxu0 0
        %1086 = vmatpush1.bf16.msra.mxu0 0
        %1087 = vmatprep.subr.bf16.mxu0 0
        %1088 = vmatpush1.bf16.msra.mxu0 0
        %1089 = vmatprep.subr.bf16.mxu0 0
        %1090 = vmatpush1.bf16.msra.mxu0 0
        %1091 = vmatprep.subr.bf16.mxu0 0
        %1092 = vmatpush1.bf16.msra.mxu0 0
        %1093 = vmatprep.subr.bf16.mxu0 0
        %1094 = vmatpush1.bf16.msra.mxu0 0
        %1095 = vmatprep.subr.bf16.mxu0 0
        %1096 = vmatpush1.bf16.msra.mxu0 0
        %1097 = vmatprep.subr.bf16.mxu0 0
        %1098 = vmatpush1.bf16.msra.mxu0 %v1070
        %1099 = vmatprep.subr.bf16.mxu0 0
        %1100 = vmatpush1.bf16.msra.mxu0 %v1069
        %1101 = vmatprep.subr.bf16.mxu0 0
        %1102 = vmatpush2.bf16.msra.mxu0 0
        %1103 = vmatprep.subr.bf16.mxu0 0
        %1104 = vmatpush2.bf16.msra.mxu0 0
        %1105 = vmatprep.subr.bf16.mxu0 0
        %1106 = vmatpush2.bf16.msra.mxu0 0
        %1107 = vmatprep.subr.bf16.mxu0 0
        %1108 = vmatpush2.bf16.msra.mxu0 0
        %1109 = vmatprep.subr.bf16.mxu0 0
        %1110 = vmatpush2.bf16.msra.mxu0 0
        %1111 = vmatprep.subr.bf16.mxu0 0
        %1112 = vmatpush2.bf16.msra.mxu0 0
        %1113 = vmatprep.subr.bf16.mxu0 0
        %1114 = vmatpush2.bf16.msra.mxu0 0
        %1115 = vmatprep.subr.bf16.mxu0 0
        %1116 = vmatpush2.bf16.msra.mxu0 0
        %1117 = vmatprep.mubr.bf16.mxu0 0
        %1118 = vmatmul.mubr.bf16.gmra.mxu0 %v1074
        %v1119 = vpop.f32.mrf.mxu0
        %v1120 = vadd.f32 %v1039, %v1119
        %v1121 = vpop.f32.mrf.mxu0
        %v1122 = vpop.f32.mrf.mxu0
        %v1123 = vadd.f32 %v1039, %v1122
        %v1124 = vpop.f32.mrf.mxu0
        %1125 = vmatprep.mubr.bf16.mxu0 0
        %1126 = vmatmul.mubr.bf16.gmra.mxu0 %v1077
        %v1127 = vpop.f32.mrf.mxu0
        %v1128 = vadd.f32 %v1039, %v1127
        %v1129 = vpop.f32.mrf.mxu0
        %v1130 = vpop.f32.mrf.mxu0
        %v1131 = vadd.f32 %v1039, %v1130
        %v1132 = vpop.f32.mrf.mxu0
        %1133 = vmatprep.mubr.bf16.mxu0 0
        %1134 = vmatmul.mubr.bf16.gmra.mxu0 %v1080
        %v1135 = vpop.f32.mrf.mxu0
        %v1136 = vadd.f32 %v1039, %v1135
        %v1137 = vpop.f32.mrf.mxu0
        %v1138 = vpop.f32.mrf.mxu0
        %v1139 = vadd.f32 %v1039, %v1138
        %v1140 = vpop.f32.mrf.mxu0
        %1141 = vmatprep.mubr.bf16.mxu0 0
        %1142 = vmatmul.mubr.bf16.gmra.mxu0 %v1083
        %v1143 = vpop.f32.mrf.mxu0
        %v1144 = vadd.f32 %v1039, %v1143
        %v1145 = vpop.f32.mrf.mxu0
        %v1146 = vpop.f32.mrf.mxu0
        %v1147 = vadd.f32 %v1039, %v1146
        %v1148 = vpop.f32.mrf.mxu0
        %1149 = vdwg.mxu0
        %vm1150 = vcmask 64512
        %v1151 = vsel %vm1150, %v1120, -inf
        %1152 = vmax.xlane.f32.xlu0 %v1151
        %v1153 = vpop.xlane.xlu0 %1152
        %v1154 = vsel %vm1150, %v1123, -inf
        %1155 = vmax.xlane.f32.xlu0 %v1154
        %v1156 = vpop.xlane.xlu0 %1155
        %v1157 = vsel %vm1150, %v1128, -inf
        %1158 = vmax.xlane.f32.xlu0 %v1157
        %v1159 = vpop.xlane.xlu0 %1158
        %v1160 = vsel %vm1150, %v1131, -inf
        %1161 = vmax.xlane.f32.xlu0 %v1160
        %v1162 = vpop.xlane.xlu0 %1161
        %v1163 = vsel %vm1150, %v1136, -inf
        %1164 = vmax.xlane.f32.xlu0 %v1163
        %v1165 = vpop.xlane.xlu0 %1164
        %v1166 = vsel %vm1150, %v1139, -inf
        %1167 = vmax.xlane.f32.xlu0 %v1166
        %v1168 = vpop.xlane.xlu0 %1167
        %v1169 = vsel %vm1150, %v1144, -inf
        %1170 = vmax.xlane.f32.xlu0 %v1169
        %v1171 = vpop.xlane.xlu0 %1170
        %v1172 = vsel %vm1150, %v1147, -inf
        %1173 = vmax.xlane.f32.xlu0 %v1172
        %v1174 = vpop.xlane.xlu0 %1173
        %v1175 = vsub.f32 %v1120, %v1153
        %v1176 = vsub.f32 %v1123, %v1156
        %v1177 = vsub.f32 %v1128, %v1159
        %v1178 = vsub.f32 %v1131, %v1162
        %v1179 = vsub.f32 %v1136, %v1165
        %v1180 = vsub.f32 %v1139, %v1168
        %v1181 = vsub.f32 %v1144, %v1171
        %v1182 = vsub.f32 %v1147, %v1174
        %v1183 = vmul.f32 %v1175, 1.442695
        %v1184 = vpow.pop %v1183
        %v1185 = vmul.f32 %v1176, 1.442695
        %v1186 = vpow.pop %v1185
        %v1187 = vmul.f32 %v1177, 1.442695
        %v1188 = vpow.pop %v1187
        %v1189 = vmul.f32 %v1178, 1.442695
        %v1190 = vpow.pop %v1189
        %v1191 = vmul.f32 %v1179, 1.442695
        %v1192 = vpow.pop %v1191
        %v1193 = vmul.f32 %v1180, 1.442695
        %v1194 = vpow.pop %v1193
        %v1195 = vmul.f32 %v1181, 1.442695
        %v1196 = vpow.pop %v1195
        %v1197 = vmul.f32 %v1182, 1.442695
        %v1198 = vpow.pop %v1197
        %v1199 = vsel %vm1150, %v1184, 0.0
        %1200 = vadd.xlane.f32.xlu0 %v1199
        %v1201 = vpop.xlane.xlu0 %1200
        %v1202 = vsel %vm1150, %v1186, 0.0
        %1203 = vadd.xlane.f32.xlu0 %v1202
        %v1204 = vpop.xlane.xlu0 %1203
        %v1205 = vsel %vm1150, %v1188, 0.0
        %1206 = vadd.xlane.f32.xlu0 %v1205
        %v1207 = vpop.xlane.xlu0 %1206
        %v1208 = vsel %vm1150, %v1190, 0.0
        %1209 = vadd.xlane.f32.xlu0 %v1208
        %v1210 = vpop.xlane.xlu0 %1209
        %v1211 = vsel %vm1150, %v1192, 0.0
        %1212 = vadd.xlane.f32.xlu0 %v1211
        %v1213 = vpop.xlane.xlu0 %1212
        %v1214 = vsel %vm1150, %v1194, 0.0
        %1215 = vadd.xlane.f32.xlu0 %v1214
        %v1216 = vpop.xlane.xlu0 %1215
        %v1217 = vsel %vm1150, %v1196, 0.0
        %1218 = vadd.xlane.f32.xlu0 %v1217
        %v1219 = vpop.xlane.xlu0 %1218
        %v1220 = vsel %vm1150, %v1198, 0.0
        %1221 = vadd.xlane.f32.xlu0 %v1220
        %v1222 = vpop.xlane.xlu0 %1221
        %v1223 = vlog2.pop %v1201
        %v1224 = vmul.f32 %v1223, 0.6931472
        %v1225 = vlog2.pop %v1204
        %v1226 = vmul.f32 %v1225, 0.6931472
        %v1227 = vlog2.pop %v1207
        %v1228 = vmul.f32 %v1227, 0.6931472
        %v1229 = vlog2.pop %v1210
        %v1230 = vmul.f32 %v1229, 0.6931472
        %v1231 = vlog2.pop %v1213
        %v1232 = vmul.f32 %v1231, 0.6931472
        %v1233 = vlog2.pop %v1216
        %v1234 = vmul.f32 %v1233, 0.6931472
        %v1235 = vlog2.pop %v1219
        %v1236 = vmul.f32 %v1235, 0.6931472
        %v1237 = vlog2.pop %v1222
        %v1238 = vmul.f32 %v1237, 0.6931472
        %v1239 = vadd.f32 %v1153, %v1224
        %v1240 = vadd.f32 %v1156, %v1226
        %v1241 = vadd.f32 %v1159, %v1228
        %v1242 = vadd.f32 %v1162, %v1230
        %v1243 = vadd.f32 %v1165, %v1232
        %v1244 = vadd.f32 %v1168, %v1234
        %v1245 = vadd.f32 %v1171, %v1236
        %v1246 = vadd.f32 %v1174, %v1238
        %v1247 = vld [vmem:[%s475] sm:$0xff]
        %v1248 = vld [vmem:[%s475 + $0x8] sm:$0xff]
        %v1249 = vld [vmem:[%s475 + $0x10] sm:$0xff]
        %v1250 = vld [vmem:[%s475 + $0x18] sm:$0xff]
        %v1251 = vld [vmem:[%s475 + $0x20] sm:$0xff]
        %v1252 = vld [vmem:[%s475 + $0x28] sm:$0xff]
        %v1253 = vld [vmem:[%s475 + $0x30] sm:$0xff]
        %v1254 = vld [vmem:[%s475 + $0x38] sm:$0xff]
        %v1255 = vlaneseq
        %v1256 = vand.u32 %v1255, 127
        %1257 = vset.pattern.permute.xlu0 0
        %1258 = vperm.xlu0 %1257, %v1247
        %v1259 = vpop.permute.xlu0 %1258
        %1260 = vset.pattern.permute.xlu0 0
        %1261 = vperm.xlu0 %1260, %v1248
        %v1262 = vpop.permute.xlu0 %1261
        %1263 = vset.pattern.permute.xlu0 0
        %1264 = vperm.xlu0 %1263, %v1249
        %v1265 = vpop.permute.xlu0 %1264
        %1266 = vset.pattern.permute.xlu0 0
        %1267 = vperm.xlu0 %1266, %v1250
        %v1268 = vpop.permute.xlu0 %1267
        %1269 = vset.pattern.permute.xlu0 0
        %1270 = vperm.xlu0 %1269, %v1251
        %v1271 = vpop.permute.xlu0 %1270
        %1272 = vset.pattern.permute.xlu0 0
        %1273 = vperm.xlu0 %1272, %v1252
        %v1274 = vpop.permute.xlu0 %1273
        %1275 = vset.pattern.permute.xlu0 0
        %1276 = vperm.xlu0 %1275, %v1253
        %v1277 = vpop.permute.xlu0 %1276
        %1278 = vset.pattern.permute.xlu0 0
        %1279 = vperm.xlu0 %1278, %v1254
        %v1280 = vpop.permute.xlu0 %1279
        %vm1281 = vcmp.eq.s32.totalorder %v1256, %v1259
        %vm1282 = vcmp.eq.s32.totalorder %v1256, %v1262
        %vm1283 = vcmp.eq.s32.totalorder %v1256, %v1265
        %vm1284 = vcmp.eq.s32.totalorder %v1256, %v1268
        %vm1285 = vcmp.eq.s32.totalorder %v1256, %v1271
        %vm1286 = vcmp.eq.s32.totalorder %v1256, %v1274
        %vm1287 = vcmp.eq.s32.totalorder %v1256, %v1277
        %vm1288 = vcmp.eq.s32.totalorder %v1256, %v1280
        %v1289 = vsel %vm1281, %v1120, 0.0
        %v1290 = vsel %vm1282, %v1123, 0.0
        %v1291 = vsel %vm1283, %v1128, 0.0
        %v1292 = vsel %vm1284, %v1131, 0.0
        %v1293 = vsel %vm1285, %v1136, 0.0
        %v1294 = vsel %vm1286, %v1139, 0.0
        %v1295 = vsel %vm1287, %v1144, 0.0
        %v1296 = vsel %vm1288, %v1147, 0.0
        %v1297 = vsel %vm1150, %v1289, 0.0
        %1298 = vadd.xlane.f32.xlu0 %v1297
        %v1299 = vpop.xlane.xlu0 %1298
        %v1300 = vsel %vm1150, %v1290, 0.0
        %1301 = vadd.xlane.f32.xlu0 %v1300
        %v1302 = vpop.xlane.xlu0 %1301
        %v1303 = vsel %vm1150, %v1291, 0.0
        %1304 = vadd.xlane.f32.xlu0 %v1303
        %v1305 = vpop.xlane.xlu0 %1304
        %v1306 = vsel %vm1150, %v1292, 0.0
        %1307 = vadd.xlane.f32.xlu0 %v1306
        %v1308 = vpop.xlane.xlu0 %1307
        %v1309 = vsel %vm1150, %v1293, 0.0
        %1310 = vadd.xlane.f32.xlu0 %v1309
        %v1311 = vpop.xlane.xlu0 %1310
        %v1312 = vsel %vm1150, %v1294, 0.0
        %1313 = vadd.xlane.f32.xlu0 %v1312
        %v1314 = vpop.xlane.xlu0 %1313
        %v1315 = vsel %vm1150, %v1295, 0.0
        %1316 = vadd.xlane.f32.xlu0 %v1315
        %v1317 = vpop.xlane.xlu0 %1316
        %v1318 = vsel %vm1150, %v1296, 0.0
        %1319 = vadd.xlane.f32.xlu0 %v1318
        %v1320 = vpop.xlane.xlu0 %1319
        %v1321 = vsub.f32 %v1239, %v1299
        %v1322 = vsub.f32 %v1240, %v1302
        %v1323 = vsub.f32 %v1241, %v1305
        %v1324 = vsub.f32 %v1242, %v1308
        %v1325 = vsub.f32 %v1243, %v1311
        %v1326 = vsub.f32 %v1244, %v1314
        %v1327 = vsub.f32 %v1245, %v1317
        %v1328 = vsub.f32 %v1246, %v1320
        %v1329 = vld [vmem:[%s487] sm:$0xff]
        %v1330 = vld [vmem:[%s487 + $0x8] sm:$0xff]
        %v1331 = vld [vmem:[%s487 + $0x10] sm:$0xff]
        %v1332 = vld [vmem:[%s487 + $0x18] sm:$0xff]
        %v1333 = vld [vmem:[%s487 + $0x20] sm:$0xff]
        %v1334 = vld [vmem:[%s487 + $0x28] sm:$0xff]
        %v1335 = vld [vmem:[%s487 + $0x30] sm:$0xff]
        %v1336 = vld [vmem:[%s487 + $0x38] sm:$0xff]
        %v1337 = vld [vmem:[#allocation3] sm:$0xff]
        %v1338 = vld [vmem:[#allocation3 + $0x8] sm:$0xff]
        %v1339 = vmul.f32 %v1329, %v1321
        %v1340 = vmul.f32 %v1330, %v1322
        %v1341 = vmul.f32 %v1331, %v1323
        %v1342 = vmul.f32 %v1332, %v1324
        %v1343 = vmul.f32 %v1333, %v1325
        %v1344 = vmul.f32 %v1334, %v1326
        %v1345 = vmul.f32 %v1335, %v1327
        %v1346 = vmul.f32 %v1336, %v1328
        %vm1347 = vcmask 15368
        %v1348 = vsel %vm1347, %v1339, 0.0
        %v1349 = vsel %vm1347, %v1341, 0.0
        %v1350 = vadd.f32 %v1348, %v1349
        %v1351 = vsel %vm1347, %v1343, 0.0
        %v1352 = vadd.f32 %v1350, %v1351
        %v1353 = vsel %vm1347, %v1345, 0.0
        %v1354 = vadd.f32 %v1352, %v1353
        %v1355 = vsel %vm1347, %v1340, 0.0
        %v1356 = vsel %vm1347, %v1342, 0.0
        %v1357 = vadd.f32 %v1355, %v1356
        %v1358 = vsel %vm1347, %v1344, 0.0
        %v1359 = vadd.f32 %v1357, %v1358
        %v1360 = vsel %vm1347, %v1346, 0.0
        %v1361 = vadd.f32 %v1359, %v1360
        %1364 = vrot.lane.b32.xlu0 %v1354, 127
        %v1365 = vpop.permute.xlu0 %1364
        %1366 = vrot.lane.b32.xlu0 %v1361, 127
        %v1367 = vpop.permute.xlu0 %1366
        %v1370 = vadd.f32 %v1337, %v1365
        %v1371 = vadd.f32 %v1338, %v1367
        %vm1372 = vcmask 7168
        %1373 = vst.msk [vmem:[#allocation3] sm:$0xff] %vm1372, %v1370
        %1374 = vst.msk [vmem:[#allocation3 + $0x8] sm:$0xff] %vm1372, %v1371
        %v1375 = vld [vmem:[#allocation4] sm:$0xff]
        %v1376 = vld [vmem:[#allocation4 + $0x8] sm:$0xff]
        %v1377 = vsel %vm1347, %v1329, 0.0
        %v1378 = vsel %vm1347, %v1331, 0.0
        %v1379 = vadd.f32 %v1377, %v1378
        %v1380 = vsel %vm1347, %v1333, 0.0
        %v1381 = vadd.f32 %v1379, %v1380
        %v1382 = vsel %vm1347, %v1335, 0.0
        %v1383 = vadd.f32 %v1381, %v1382
        %v1384 = vsel %vm1347, %v1330, 0.0
        %v1385 = vsel %vm1347, %v1332, 0.0
        %v1386 = vadd.f32 %v1384, %v1385
        %v1387 = vsel %vm1347, %v1334, 0.0
        %v1388 = vadd.f32 %v1386, %v1387
        %v1389 = vsel %vm1347, %v1336, 0.0
        %v1390 = vadd.f32 %v1388, %v1389
        %1393 = vrot.lane.b32.xlu0 %v1383, 127
        %v1394 = vpop.permute.xlu0 %1393
        %1395 = vrot.lane.b32.xlu0 %v1390, 127
        %v1396 = vpop.permute.xlu0 %1395
        %v1399 = vadd.f32 %v1375, %v1394
        %v1400 = vadd.f32 %v1376, %v1396
        %1401 = vst.msk [vmem:[#allocation4] sm:$0xff] %vm1372, %v1399
        %1402 = vst.msk [vmem:[#allocation4 + $0x8] sm:$0xff] %vm1372, %v1400
        %p1403 = scmp.eq.s32.totalorder %s28, 1
        // Predicated region
        $region61: #{tpu_custom_call.1} parent=55 // pred_check
          %p1404 = pneg %p1403
        $region62: #{tpu_custom_call.1} parent=55 // pred_check_branch
          %1406 = sbr.rel (%p1404) target = $region64
        $region63: #{tpu_custom_call.1} parent=55 // pred_region
          %v1407 = vld [vmem:[#allocation3] sm:$0xff]
          %v1408 = vld [vmem:[#allocation3 + $0x8] sm:$0xff]
          %v1409 = vld [vmem:[#allocation4] sm:$0xff]
          %v1410 = vld [vmem:[#allocation4 + $0x8] sm:$0xff]
          %v1411 = vrcp.pop %v1409
          %v1412 = vmul.f32 %v1407, %v1411
          %v1413 = vrcp.pop %v1410
          %v1414 = vmul.f32 %v1408, %v1413
          %1415 = vst.msk [vmem:[%s500] sm:$0xff] %vm1372, %v1412
          %1416 = vst.msk [vmem:[%s500 + $0x8] sm:$0xff] %vm1372, %v1414
          %v1417 = vld [vmem:[#allocation2] sm:$0xff]
          %v1418 = vld [vmem:[#allocation2 + $0x8] sm:$0xff]
          %1419 = vst.msk [vmem:[#allocation6] sm:$0xff] %vm578, %v1417
          %1420 = vst.msk [vmem:[#allocation6 + $0x8] sm:$0xff] %vm578, %v1418
        $region64: #{tpu_custom_call.1} parent=55 // pred_fallthru
          _
        %s1421 = smul.u32 2, %s27
        %p1422 = scmp.lt.s32.totalorder %s1421, 1
        %s1423 = scalar_select %p1422, %s1421, 1
        %s1424 = smul.addr %s1423, 8
        %s1425 = scalar_lea.vmem %s9, %s1424
        // Predicated region
        $region65: #{tpu_custom_call.1} parent=55 // pred_check
          %p1426 = pneg %p268
        $region66: #{tpu_custom_call.1} parent=55 // pred_check_branch
          %1428 = sbr.rel (%p1426) target = $region68
        $region67: #{tpu_custom_call.1} parent=55 // pred_region
          %s1429 = smul.u32 2, %s27
        $region68: #{tpu_custom_call.1} parent=55 // pred_fallthru
          _
        // Predicated region
        $region69: #{tpu_custom_call.1} parent=55 // pred_check
          %p1430 = pneg %p294
        $region70: #{tpu_custom_call.1} parent=55 // pred_check_branch
          %1432 = sbr.rel (%p1430) target = $region72
        $region71: #{tpu_custom_call.1} parent=55 // pred_region
          %s1433 = smul.u32 2, %s27
          %s1435 = ssub.s32 256, 256
          %1436 = vsyncadd [#allocation7], %s1435
          %s1437 = smul.addr %s1433, 128
          %s1438 = scalar_lea.hbm %s10, %s1437
          %s1439 = sshll.u32 [#allocation6], 4
          %s1440 = int_to_ptr.vmem [resolvable:$true] %s1439
          %1445 = dma.vmem_to_hbm [thread:$0]  %s1440, 256, %s1438, [#allocation7], 128, 128, 8
        $region72: #{tpu_custom_call.1} parent=55 // pred_fallthru
          _
        // Predicated region
        $region73: #{tpu_custom_call.1} parent=55 // pred_check
          %p1446 = pneg %p268
        $region74: #{tpu_custom_call.1} parent=55 // pred_check_branch
          %1448 = sbr.rel (%p1446) target = $region76
        $region75: #{tpu_custom_call.1} parent=55 // pred_region
          %s1449 = smul.u32 2, %s27
          %p1450 = scmp.lt.s32.totalorder %s1449, 1
          %s1451 = scalar_select %p1450, %s1449, 1
          %s1452 = smul.addr %s1451, 8
          %s1453 = scalar_lea.vmem %s9, %s1452
        $region76: #{tpu_custom_call.1} parent=55 // pred_fallthru
          _
        // Predicated region
        $region77: #{tpu_custom_call.1} parent=55 // pred_check
          %p1454 = pneg %p294
        $region78: #{tpu_custom_call.1} parent=55 // pred_check_branch
          %1456 = sbr.rel (%p1454) target = $region80
        $region79: #{tpu_custom_call.1} parent=55 // pred_region
          %1457 = dma.done [#allocation7], 256
        $region80: #{tpu_custom_call.1} parent=55 // pred_fallthru
          _
      $region56: #{tpu_custom_call.1} parent=5 // pred_fallthru
        _
      %p1458 = scmp.le.s32.totalorder 2, %s18
      // Predicated region
      $region81: #{tpu_custom_call.1} parent=5 // pred_check
        %p1459 = pneg %p1458
      $region82: #{tpu_custom_call.1} parent=5 // pred_check_branch
        %1461 = sbr.rel (%p1459) target = $region84
      $region83: #{tpu_custom_call.1} parent=5 // pred_region
        %s1462 = ssub.s32 %s18, 2
      $region84: #{tpu_custom_call.1} parent=5 // pred_fallthru
        _
    $region6: #{tpu_custom_call.1} parent=1 // loop_footer
      %s22 = sadd.s32 1, %s18
    $region7: #{tpu_custom_call.1} parent=1 // loop_footer_branch
      %17 = sbr.rel target = $region3
    $region8: #{tpu_custom_call.1} parent=1 // loop_exit
      _
    %1463 = vsyncpa [#allocation7], 1
    %s1464 = scalar_lea.sflag [#allocation7], 1
    %1465 = vsyncpa %s1464, 1

</llo_original>
